<compile_context>
chip_gen: v7x
topology: tpu7x:2x2x1
jax: 0.10.0
libtpu: 0.0.40
codegen_flags: <defaults>
</compile_context>

<pallas_src>
import functools

import jax
import jax.numpy as jnp
from jax.experimental import pallas as pl
from jax.experimental.pallas import tpu as pltpu

LEAKY_SLOPE = 0.01  # PyTorch nn.LeakyReLU default negative_slope
LANE = 128
SUBLANE = 8


def _leaky_relu(v):
    return jnp.where(v >= 0, v, LEAKY_SLOPE * v)


def _round_up(n, m):
    return ((n + m - 1) // m) * m


def _cdiv(a, b):
    return -(-a // b)


def _num_parallel_tensorcores():
    """2 on dual-TC v7x chips, 1 on single-TC v5e/v6e (best-effort)."""
    try:
        kind = jax.devices()[0].device_kind.lower()
    except Exception:
        return 1
    return 2 if "v7" in kind else 1


# --------------------------------------------------------------------------
# Kernel: whole 4-layer MLP forward for one batch tile, entirely in VMEM.
# --------------------------------------------------------------------------
def dqn_mlp_kernel(x_ref,
                   w1_ref, b1_ref,
                   w2_ref, b2_ref,
                   w3_ref, b3_ref,
                   w4_ref, b4_ref,
                   o_ref, *, compute_dtype):
    """x_ref: (TB, Din_p); wN: (in_p, out_p) compute_dtype; bN: (1, out_p) f32;
    o_ref: (TB, Dout_p) f32.  MXU inputs are compute_dtype, accumulation f32."""
    h = x_ref[...].astype(compute_dtype)
    for w_ref, b_ref in ((w1_ref, b1_ref), (w2_ref, b2_ref), (w3_ref, b3_ref)):
        acc = jnp.dot(h, w_ref[...],
                      preferred_element_type=jnp.float32) + b_ref[...]
        # Cast at the producer: inter-layer activation stored narrow.
        h = _leaky_relu(acc).astype(compute_dtype)
    out = jnp.dot(h, w4_ref[...],
                  preferred_element_type=jnp.float32) + b4_ref[...]
    o_ref[...] = out.astype(o_ref.dtype)


# --------------------------------------------------------------------------
# One-time parameter preparation (pad + cast, OUTSIDE the per-step hot path).
# --------------------------------------------------------------------------
def prepare_params(params, compute_dtype=jnp.float32):
    """params = (w1, b1, ..., w4, b4), weights in [in, out] layout.

    Hidden/output feature dims are zero-padded to a multiple of 128 lanes,
    the input dim only to a multiple of 8; weights are cast to compute_dtype,
    biases kept f32.  Returns a tuple ready for dqn_forward."""
    w1, b1, w2, b2, w3, b3, w4, b4 = params
    ws = (w1, w2, w3, w4)
    bs = (b1, b2, b3, b4)
    dims = [w1.shape[0], w1.shape[1], w2.shape[1], w3.shape[1], w4.shape[1]]
    dims_p = [_round_up(dims[0], SUBLANE)] + [_round_up(d, LANE) for d in dims[1:]]
    out = []
    for i, (w, b) in enumerate(zip(ws, bs)):
        wp = jnp.pad(w, ((0, dims_p[i] - w.shape[0]),
                         (0, dims_p[i + 1] - w.shape[1]))).astype(compute_dtype)
        bp = jnp.pad(jnp.asarray(b).reshape(1, -1),
                     ((0, 0), (0, dims_p[i + 1] - w.shape[1]))).astype(jnp.float32)
        out += [wp, bp]
    return tuple(out)


# --------------------------------------------------------------------------
# Forward wrapper.
# --------------------------------------------------------------------------
@functools.partial(
    jax.jit,
    static_argnames=("d_out", "tile_b", "max_tile_b", "single_buffer_weights"))
def dqn_forward(x, padded_params, *, d_out, tile_b=None, max_tile_b=512,
                single_buffer_weights=True):
    """x: (B, d_in); padded_params from prepare_params(); returns (B, d_out) f32."""
    w1p, b1p, w2p, b2p, w3p, b3p, w4p, b4p = padded_params
    ws = (w1p, w2p, w3p, w4p)
    bs = (b1p, b2p, b3p, b4p)
    compute_dtype = ws[0].dtype

    B, d_in = x.shape
    d_in_p = ws[0].shape[0]
    d_out_p = ws[3].shape[1]

    # ---- Grid / tile selection (per generation) ---------------------------
    if tile_b is None:
        n_par = _num_parallel_tensorcores()          # 1 on v5e/v6e, 2 on v7x
        b8 = _round_up(B, SUBLANE)
        tile_b = min(_round_up(_cdiv(b8, n_par), SUBLANE), max_tile_b)
    else:
        tile_b = _round_up(min(tile_b, _round_up(B, SUBLANE)), SUBLANE)
    tile_b = max(tile_b, SUBLANE)
    Bp = _round_up(B, tile_b)

    # ---- Pad x only when actually needed (no-op at the common shapes) -----
    pad_rows, pad_cols = Bp - B, d_in_p - d_in
    if pad_rows or pad_cols:
        x = jnp.pad(x, ((0, pad_rows), (0, pad_cols)))

    # ---- Weight/bias specs: grid-invariant, optionally single-buffered ----
    def const_spec(shape):
        if single_buffer_weights:
            return pl.BlockSpec(shape, lambda i: (0, 0),
                                pipeline_mode=pl.Buffered(1))
        return pl.BlockSpec(shape, lambda i: (0, 0))

    # ---- VMEM budget: only raise the scoped limit when the default 32 MiB
    #      would be exceeded (large nb_neurons); stay under v7x's 64 MiB. ----
    buf_count = 1 if single_buffer_weights else 2
    w_bytes = sum(int(a.size) * a.dtype.itemsize for a in ws + bs)
    act_bytes = 2 * tile_b * (d_in_p * x.dtype.itemsize + d_out_p * 4)
    need = buf_count * w_bytes + act_bytes + (4 << 20)   # margin for temporaries
    vmem_limit = None if need <= (32 << 20) else int(min(need, 60 << 20))
    # TODO(synk): beyond ~2-3K hidden units the resident-weight design should
    # switch to hidden-dim tiling (nested emit_pipeline) instead.

    kernel = functools.partial(dqn_mlp_kernel, compute_dtype=compute_dtype)

    out_p = pl.pallas_call(
        kernel,
        out_shape=jax.ShapeDtypeStruct((Bp, d_out_p), jnp.float32),
        grid_spec=pltpu.PrefetchScalarGridSpec(
            num_scalar_prefetch=0,
            grid=(Bp // tile_b,),
            in_specs=[
                pl.BlockSpec((tile_b, d_in_p), lambda i: (i, 0)),
                const_spec(ws[0].shape), const_spec(bs[0].shape),
                const_spec(ws[1].shape), const_spec(bs[1].shape),
                const_spec(ws[2].shape), const_spec(bs[2].shape),
                const_spec(ws[3].shape), const_spec(bs[3].shape),
            ],
            out_specs=pl.BlockSpec((tile_b, d_out_p), lambda i: (i, 0)),
        ),
        compiler_params=pltpu.CompilerParams(
            dimension_semantics=("parallel",),
            vmem_limit_bytes=vmem_limit),
    )(x, ws[0], bs[0], ws[1], bs[1], ws[2], bs[2], ws[3], bs[3])

    # Strip padding; output stays f32 (no silent downcast of Q-values).
    if Bp != B or d_out_p != d_out:
        out_p = out_p[:B, :d_out]
    return out_p


# --------------------------------------------------------------------------
# Parameter init (Xavier-uniform weights, zero biases — as in the PyTorch module)
# --------------------------------------------------------------------------
def init_dqn_params(key, input_dim, output_dim, nb_neurons):
    dims = [(input_dim, nb_neurons),
            (nb_neurons, nb_neurons),
            (nb_neurons, nb_neurons),
            (nb_neurons, output_dim)]
    params = []
    for fan_in, fan_out in dims:
        key, sub = jax.random.split(key)
        bound = (6.0 / (fan_in + fan_out)) ** 0.5
        w = jax.random.uniform(sub, (fan_in, fan_out), jnp.float32,
                               minval=-bound, maxval=bound)
        b = jnp.zeros((fan_out,), jnp.float32)
        params += [w, b]
    return tuple(params)


def dqn_forward_ref(x, params):
    """Pure-JAX f32 reference of the PyTorch forward."""
    w1, b1, w2, b2, w3, b3, w4, b4 = params
    h = _leaky_relu(x @ w1 + b1)
    h = _leaky_relu(h @ w2 + b2)
    h = _leaky_relu(h @ w3 + b3)
    return h @ w4 + b4


if __name__ == "__main__":
    # Small shapes consistent with DQNModel(input_dim, output_dim, nb_neurons).
    batch, input_dim, output_dim, nb_neurons = 64, 32, 8, 128

    key = jax.random.PRNGKey(0)
    key, xkey = jax.random.split(key)
    x = jax.random.normal(xkey, (batch, input_dim), jnp.float32)
    params = init_dqn_params(key, input_dim, output_dim, nb_neurons)
    ref = dqn_forward_ref(x, params)

    def run(prepared):
        # Prefer single-buffered grid-invariant weights (halves their VMEM);
        # fall back to default double-buffering if this JAX build rejects
        # pl.Buffered(1) on the top-level pallas_call.
        try:
            return jax.block_until_ready(
                dqn_forward(x, prepared, d_out=output_dim,
                            single_buffer_weights=True))
        except Exception:
            return jax.block_until_ready(
                dqn_forward(x, prepared, d_out=output_dim,
                            single_buffer_weights=False))

    # 1) f32 path (default — recommended for DQN action selection): tight check.
    out_f32 = run(prepare_params(params, jnp.float32))
    assert out_f32.shape == (batch, output_dim)
    assert out_f32.dtype == jnp.float32
    assert jnp.allclose(out_f32, ref, atol=1e-4, rtol=1e-4)

    # 2) bf16-MXU-input / f32-accumulate path (v6e/v7x throughput path).
    out_bf16 = run(prepare_params(params, jnp.bfloat16))
    assert out_bf16.shape == (batch, output_dim)
    assert out_bf16.dtype == jnp.float32
    assert jnp.allclose(out_bf16, ref, atol=5e-2, rtol=5e-2)

    print("KERNEL_OK")
</pallas_src>

<mosaic_0001>
module attributes {stable_mosaic.version = 11 : i64} {
  func.func @dqn_mlp_kernel(%arg0: i32, %arg1: memref<64x32xf32, #tpu.memory_space<vmem>>, %arg2: memref<32x128xf32, #tpu.memory_space<vmem>>, %arg3: memref<1x128xf32, #tpu.memory_space<vmem>>, %arg4: memref<128x128xf32, #tpu.memory_space<vmem>>, %arg5: memref<1x128xf32, #tpu.memory_space<vmem>>, %arg6: memref<128x128xf32, #tpu.memory_space<vmem>>, %arg7: memref<1x128xf32, #tpu.memory_space<vmem>>, %arg8: memref<128x128xf32, #tpu.memory_space<vmem>>, %arg9: memref<1x128xf32, #tpu.memory_space<vmem>>, %arg10: memref<64x128xf32, #tpu.memory_space<vmem>>) attributes {dimension_semantics = [#tpu.dimension_semantics<parallel>], iteration_bounds = array<i64: 1>, scalar_prefetch = 0 : i64, scratch_operands = 0 : i64, tpu.core_type = #tpu.core_type<tc>, window_params = [{transform_indices = @transform_0, window_bounds = array<i64: 64, 32>}, {pipeline_mode = #tpu.pipeline_mode<synchronous>, transform_indices = @transform_1, window_bounds = array<i64: 32, 128>}, {pipeline_mode = #tpu.pipeline_mode<synchronous>, transform_indices = @transform_2, window_bounds = array<i64: 1, 128>}, {pipeline_mode = #tpu.pipeline_mode<synchronous>, transform_indices = @transform_3, window_bounds = array<i64: 128, 128>}, {pipeline_mode = #tpu.pipeline_mode<synchronous>, transform_indices = @transform_4, window_bounds = array<i64: 1, 128>}, {pipeline_mode = #tpu.pipeline_mode<synchronous>, transform_indices = @transform_5, window_bounds = array<i64: 128, 128>}, {pipeline_mode = #tpu.pipeline_mode<synchronous>, transform_indices = @transform_6, window_bounds = array<i64: 1, 128>}, {pipeline_mode = #tpu.pipeline_mode<synchronous>, transform_indices = @transform_7, window_bounds = array<i64: 128, 128>}, {pipeline_mode = #tpu.pipeline_mode<synchronous>, transform_indices = @transform_8, window_bounds = array<i64: 1, 128>}, {transform_indices = @transform_9, window_bounds = array<i64: 64, 128>}]} {
    %c0 = arith.constant 0 : index
    %c0_0 = arith.constant 0 : index
    %0 = vector.load %arg1[%c0, %c0_0] : memref<64x32xf32, #tpu.memory_space<vmem>>, vector<64x32xf32>
    %c0_1 = arith.constant 0 : index
    %c0_2 = arith.constant 0 : index
    %1 = vector.load %arg2[%c0_1, %c0_2] : memref<32x128xf32, #tpu.memory_space<vmem>>, vector<32x128xf32>
    %cst = arith.constant dense<0.000000e+00> : vector<64x128xf32>
    %2 = tpu.matmul %0, %1, %cst {dimension_numbers = #tpu.dot_dimension_numbers<[1], [0], [0], [1], [0, 0, 1, 1], [], []>} : vector<64x32xf32>, vector<32x128xf32>, vector<64x128xf32> -> vector<64x128xf32>
    %c0_3 = arith.constant 0 : index
    %c0_4 = arith.constant 0 : index
    %3 = vector.load %arg3[%c0_3, %c0_4] : memref<1x128xf32, #tpu.memory_space<vmem>>, vector<1x128xf32>
    %4 = vector.broadcast %3 : vector<1x128xf32> to vector<64x128xf32>
    %5 = arith.addf %2, %4 : vector<64x128xf32>
    %cst_5 = arith.constant 0.000000e+00 : f32
    %6 = vector.broadcast %cst_5 : f32 to vector<64x128xf32>
    %7 = arith.cmpf oge, %5, %6 : vector<64x128xf32>
    %cst_6 = arith.constant 0.00999999977 : f32
    %8 = vector.broadcast %cst_6 : f32 to vector<64x128xf32>
    %9 = arith.mulf %8, %5 : vector<64x128xf32>
    %10 = arith.select %7, %5, %9 : vector<64x128xi1>, vector<64x128xf32>
    %c0_7 = arith.constant 0 : index
    %c0_8 = arith.constant 0 : index
    %11 = vector.load %arg4[%c0_7, %c0_8] : memref<128x128xf32, #tpu.memory_space<vmem>>, vector<128x128xf32>
    %cst_9 = arith.constant dense<0.000000e+00> : vector<64x128xf32>
    %12 = tpu.matmul %10, %11, %cst_9 {dimension_numbers = #tpu.dot_dimension_numbers<[1], [0], [0], [1], [0, 0, 1, 1], [], []>} : vector<64x128xf32>, vector<128x128xf32>, vector<64x128xf32> -> vector<64x128xf32>
    %c0_10 = arith.constant 0 : index
    %c0_11 = arith.constant 0 : index
    %13 = vector.load %arg5[%c0_10, %c0_11] : memref<1x128xf32, #tpu.memory_space<vmem>>, vector<1x128xf32>
    %14 = vector.broadcast %13 : vector<1x128xf32> to vector<64x128xf32>
    %15 = arith.addf %12, %14 : vector<64x128xf32>
    %cst_12 = arith.constant 0.000000e+00 : f32
    %16 = vector.broadcast %cst_12 : f32 to vector<64x128xf32>
    %17 = arith.cmpf oge, %15, %16 : vector<64x128xf32>
    %cst_13 = arith.constant 0.00999999977 : f32
    %18 = vector.broadcast %cst_13 : f32 to vector<64x128xf32>
    %19 = arith.mulf %18, %15 : vector<64x128xf32>
    %20 = arith.select %17, %15, %19 : vector<64x128xi1>, vector<64x128xf32>
    %c0_14 = arith.constant 0 : index
    %c0_15 = arith.constant 0 : index
    %21 = vector.load %arg6[%c0_14, %c0_15] : memref<128x128xf32, #tpu.memory_space<vmem>>, vector<128x128xf32>
    %cst_16 = arith.constant dense<0.000000e+00> : vector<64x128xf32>
    %22 = tpu.matmul %20, %21, %cst_16 {dimension_numbers = #tpu.dot_dimension_numbers<[1], [0], [0], [1], [0, 0, 1, 1], [], []>} : vector<64x128xf32>, vector<128x128xf32>, vector<64x128xf32> -> vector<64x128xf32>
    %c0_17 = arith.constant 0 : index
    %c0_18 = arith.constant 0 : index
    %23 = vector.load %arg7[%c0_17, %c0_18] : memref<1x128xf32, #tpu.memory_space<vmem>>, vector<1x128xf32>
    %24 = vector.broadcast %23 : vector<1x128xf32> to vector<64x128xf32>
    %25 = arith.addf %22, %24 : vector<64x128xf32>
    %cst_19 = arith.constant 0.000000e+00 : f32
    %26 = vector.broadcast %cst_19 : f32 to vector<64x128xf32>
    %27 = arith.cmpf oge, %25, %26 : vector<64x128xf32>
    %cst_20 = arith.constant 0.00999999977 : f32
    %28 = vector.broadcast %cst_20 : f32 to vector<64x128xf32>
    %29 = arith.mulf %28, %25 : vector<64x128xf32>
    %30 = arith.select %27, %25, %29 : vector<64x128xi1>, vector<64x128xf32>
    %c0_21 = arith.constant 0 : index
    %c0_22 = arith.constant 0 : index
    %31 = vector.load %arg8[%c0_21, %c0_22] : memref<128x128xf32, #tpu.memory_space<vmem>>, vector<128x128xf32>
    %cst_23 = arith.constant dense<0.000000e+00> : vector<64x128xf32>
    %32 = tpu.matmul %30, %31, %cst_23 {dimension_numbers = #tpu.dot_dimension_numbers<[1], [0], [0], [1], [0, 0, 1, 1], [], []>} : vector<64x128xf32>, vector<128x128xf32>, vector<64x128xf32> -> vector<64x128xf32>
    %c0_24 = arith.constant 0 : index
    %c0_25 = arith.constant 0 : index
    %33 = vector.load %arg9[%c0_24, %c0_25] : memref<1x128xf32, #tpu.memory_space<vmem>>, vector<1x128xf32>
    %34 = vector.broadcast %33 : vector<1x128xf32> to vector<64x128xf32>
    %35 = arith.addf %32, %34 : vector<64x128xf32>
    %c0_26 = arith.constant 0 : index
    %c0_27 = arith.constant 0 : index
    %36 = vector.load %arg10[%c0_26, %c0_27] : memref<64x128xf32, #tpu.memory_space<vmem>>, vector<64x128xf32>
    tpu.vector_store %arg10[%c0_26, %c0_27], %35 {strides = array<i32>} : memref<64x128xf32, #tpu.memory_space<vmem>>, vector<64x128xf32>,
    return
  }
  func.func @transform_0(%arg0: i32) -> (i32, i32) {
    %c0_i32 = arith.constant 0 : i32
    %c0_i32_0 = arith.constant 0 : i32
    return %arg0, %c0_i32 : i32, i32
  }
  func.func @transform_1(%arg0: i32) -> (i32, i32) {
    %c0_i32 = arith.constant 0 : i32
    %c0_i32_0 = arith.constant 0 : i32
    %c0_i32_1 = arith.constant 0 : i32
    return %c0_i32, %c0_i32_0 : i32, i32
  }
  func.func @transform_2(%arg0: i32) -> (i32, i32) {
    %c0_i32 = arith.constant 0 : i32
    %c0_i32_0 = arith.constant 0 : i32
    %c0_i32_1 = arith.constant 0 : i32
    return %c0_i32, %c0_i32_0 : i32, i32
  }
  func.func @transform_3(%arg0: i32) -> (i32, i32) {
    %c0_i32 = arith.constant 0 : i32
    %c0_i32_0 = arith.constant 0 : i32
    %c0_i32_1 = arith.constant 0 : i32
    return %c0_i32, %c0_i32_0 : i32, i32
  }
  func.func @transform_4(%arg0: i32) -> (i32, i32) {
    %c0_i32 = arith.constant 0 : i32
    %c0_i32_0 = arith.constant 0 : i32
    %c0_i32_1 = arith.constant 0 : i32
    return %c0_i32, %c0_i32_0 : i32, i32
  }
  func.func @transform_5(%arg0: i32) -> (i32, i32) {
    %c0_i32 = arith.constant 0 : i32
    %c0_i32_0 = arith.constant 0 : i32
    %c0_i32_1 = arith.constant 0 : i32
    return %c0_i32, %c0_i32_0 : i32, i32
  }
  func.func @transform_6(%arg0: i32) -> (i32, i32) {
    %c0_i32 = arith.constant 0 : i32
    %c0_i32_0 = arith.constant 0 : i32
    %c0_i32_1 = arith.constant 0 : i32
    return %c0_i32, %c0_i32_0 : i32, i32
  }
  func.func @transform_7(%arg0: i32) -> (i32, i32) {
    %c0_i32 = arith.constant 0 : i32
    %c0_i32_0 = arith.constant 0 : i32
    %c0_i32_1 = arith.constant 0 : i32
    return %c0_i32, %c0_i32_0 : i32, i32
  }
  func.func @transform_8(%arg0: i32) -> (i32, i32) {
    %c0_i32 = arith.constant 0 : i32
    %c0_i32_0 = arith.constant 0 : i32
    %c0_i32_1 = arith.constant 0 : i32
    return %c0_i32, %c0_i32_0 : i32, i32
  }
  func.func @transform_9(%arg0: i32) -> (i32, i32) {
    %c0_i32 = arith.constant 0 : i32
    %c0_i32_0 = arith.constant 0 : i32
    return %arg0, %c0_i32 : i32, i32
  }
}

module attributes {stable_mosaic.version = 11 : i64} {
  func.func @dqn_mlp_kernel(%arg0: i32, %arg1: memref<64x32xf32, #tpu.memory_space<vmem>>, %arg2: memref<32x128xf32, #tpu.memory_space<vmem>>, %arg3: memref<1x128xf32, #tpu.memory_space<vmem>>, %arg4: memref<128x128xf32, #tpu.memory_space<vmem>>, %arg5: memref<1x128xf32, #tpu.memory_space<vmem>>, %arg6: memref<128x128xf32, #tpu.memory_space<vmem>>, %arg7: memref<1x128xf32, #tpu.memory_space<vmem>>, %arg8: memref<128x128xf32, #tpu.memory_space<vmem>>, %arg9: memref<1x128xf32, #tpu.memory_space<vmem>>, %arg10: memref<64x128xf32, #tpu.memory_space<vmem>>) attributes {dimension_semantics = [#tpu.dimension_semantics<parallel>], iteration_bounds = array<i64: 1>, scalar_prefetch = 0 : i64, scratch_operands = 0 : i64, tpu.core_type = #tpu.core_type<tc>, window_params = [{transform_indices = @transform_0, window_bounds = array<i64: 64, 32>}, {pipeline_mode = #tpu.pipeline_mode<synchronous>, transform_indices = @transform_1, window_bounds = array<i64: 32, 128>}, {pipeline_mode = #tpu.pipeline_mode<synchronous>, transform_indices = @transform_2, window_bounds = array<i64: 1, 128>}, {pipeline_mode = #tpu.pipeline_mode<synchronous>, transform_indices = @transform_3, window_bounds = array<i64: 128, 128>}, {pipeline_mode = #tpu.pipeline_mode<synchronous>, transform_indices = @transform_4, window_bounds = array<i64: 1, 128>}, {pipeline_mode = #tpu.pipeline_mode<synchronous>, transform_indices = @transform_5, window_bounds = array<i64: 128, 128>}, {pipeline_mode = #tpu.pipeline_mode<synchronous>, transform_indices = @transform_6, window_bounds = array<i64: 1, 128>}, {pipeline_mode = #tpu.pipeline_mode<synchronous>, transform_indices = @transform_7, window_bounds = array<i64: 128, 128>}, {pipeline_mode = #tpu.pipeline_mode<synchronous>, transform_indices = @transform_8, window_bounds = array<i64: 1, 128>}, {transform_indices = @transform_9, window_bounds = array<i64: 64, 128>}]} {
    %c0 = arith.constant 0 : index
    %c0_0 = arith.constant 0 : index
    %0 = vector.load %arg1[%c0, %c0_0] : memref<64x32xf32, #tpu.memory_space<vmem>>, vector<64x32xf32>
    %c0_1 = arith.constant 0 : index
    %c0_2 = arith.constant 0 : index
    %1 = vector.load %arg2[%c0_1, %c0_2] : memref<32x128xf32, #tpu.memory_space<vmem>>, vector<32x128xf32>
    %cst = arith.constant dense<0.000000e+00> : vector<64x128xf32>
    %2 = tpu.matmul %0, %1, %cst {dimension_numbers = #tpu.dot_dimension_numbers<[1], [0], [0], [1], [0, 0, 1, 1], [], []>} : vector<64x32xf32>, vector<32x128xf32>, vector<64x128xf32> -> vector<64x128xf32>
    %c0_3 = arith.constant 0 : index
    %c0_4 = arith.constant 0 : index
    %3 = vector.load %arg3[%c0_3, %c0_4] : memref<1x128xf32, #tpu.memory_space<vmem>>, vector<1x128xf32>
    %4 = vector.broadcast %3 : vector<1x128xf32> to vector<64x128xf32>
    %5 = arith.addf %2, %4 : vector<64x128xf32>
    %cst_5 = arith.constant 0.000000e+00 : f32
    %6 = vector.broadcast %cst_5 : f32 to vector<64x128xf32>
    %7 = arith.cmpf oge, %5, %6 : vector<64x128xf32>
    %cst_6 = arith.constant 0.00999999977 : f32
    %8 = vector.broadcast %cst_6 : f32 to vector<64x128xf32>
    %9 = arith.mulf %8, %5 : vector<64x128xf32>
    %10 = arith.select %7, %5, %9 : vector<64x128xi1>, vector<64x128xf32>
    %c0_7 = arith.constant 0 : index
    %c0_8 = arith.constant 0 : index
    %11 = vector.load %arg4[%c0_7, %c0_8] : memref<128x128xf32, #tpu.memory_space<vmem>>, vector<128x128xf32>
    %cst_9 = arith.constant dense<0.000000e+00> : vector<64x128xf32>
    %12 = tpu.matmul %10, %11, %cst_9 {dimension_numbers = #tpu.dot_dimension_numbers<[1], [0], [0], [1], [0, 0, 1, 1], [], []>} : vector<64x128xf32>, vector<128x128xf32>, vector<64x128xf32> -> vector<64x128xf32>
    %c0_10 = arith.constant 0 : index
    %c0_11 = arith.constant 0 : index
    %13 = vector.load %arg5[%c0_10, %c0_11] : memref<1x128xf32, #tpu.memory_space<vmem>>, vector<1x128xf32>
    %14 = vector.broadcast %13 : vector<1x128xf32> to vector<64x128xf32>
    %15 = arith.addf %12, %14 : vector<64x128xf32>
    %cst_12 = arith.constant 0.000000e+00 : f32
    %16 = vector.broadcast %cst_12 : f32 to vector<64x128xf32>
    %17 = arith.cmpf oge, %15, %16 : vector<64x128xf32>
    %cst_13 = arith.constant 0.00999999977 : f32
    %18 = vector.broadcast %cst_13 : f32 to vector<64x128xf32>
    %19 = arith.mulf %18, %15 : vector<64x128xf32>
    %20 = arith.select %17, %15, %19 : vector<64x128xi1>, vector<64x128xf32>
    %c0_14 = arith.constant 0 : index
    %c0_15 = arith.constant 0 : index
    %21 = vector.load %arg6[%c0_14, %c0_15] : memref<128x128xf32, #tpu.memory_space<vmem>>, vector<128x128xf32>
    %cst_16 = arith.constant dense<0.000000e+00> : vector<64x128xf32>
    %22 = tpu.matmul %20, %21, %cst_16 {dimension_numbers = #tpu.dot_dimension_numbers<[1], [0], [0], [1], [0, 0, 1, 1], [], []>} : vector<64x128xf32>, vector<128x128xf32>, vector<64x128xf32> -> vector<64x128xf32>
    %c0_17 = arith.constant 0 : index
    %c0_18 = arith.constant 0 : index
    %23 = vector.load %arg7[%c0_17, %c0_18] : memref<1x128xf32, #tpu.memory_space<vmem>>, vector<1x128xf32>
    %24 = vector.broadcast %23 : vector<1x128xf32> to vector<64x128xf32>
    %25 = arith.addf %22, %24 : vector<64x128xf32>
    %cst_19 = arith.constant 0.000000e+00 : f32
    %26 = vector.broadcast %cst_19 : f32 to vector<64x128xf32>
    %27 = arith.cmpf oge, %25, %26 : vector<64x128xf32>
    %cst_20 = arith.constant 0.00999999977 : f32
    %28 = vector.broadcast %cst_20 : f32 to vector<64x128xf32>
    %29 = arith.mulf %28, %25 : vector<64x128xf32>
    %30 = arith.select %27, %25, %29 : vector<64x128xi1>, vector<64x128xf32>
    %c0_21 = arith.constant 0 : index
    %c0_22 = arith.constant 0 : index
    %31 = vector.load %arg8[%c0_21, %c0_22] : memref<128x128xf32, #tpu.memory_space<vmem>>, vector<128x128xf32>
    %cst_23 = arith.constant dense<0.000000e+00> : vector<64x128xf32>
    %32 = tpu.matmul %30, %31, %cst_23 {dimension_numbers = #tpu.dot_dimension_numbers<[1], [0], [0], [1], [0, 0, 1, 1], [], []>} : vector<64x128xf32>, vector<128x128xf32>, vector<64x128xf32> -> vector<64x128xf32>
    %c0_24 = arith.constant 0 : index
    %c0_25 = arith.constant 0 : index
    %33 = vector.load %arg9[%c0_24, %c0_25] : memref<1x128xf32, #tpu.memory_space<vmem>>, vector<1x128xf32>
    %34 = vector.broadcast %33 : vector<1x128xf32> to vector<64x128xf32>
    %35 = arith.addf %32, %34 : vector<64x128xf32>
    %c0_26 = arith.constant 0 : index
    %c0_27 = arith.constant 0 : index
    %36 = vector.load %arg10[%c0_26, %c0_27] : memref<64x128xf32, #tpu.memory_space<vmem>>, vector<64x128xf32>
    tpu.vector_store %arg10[%c0_26, %c0_27], %35 {strides = array<i32>} : memref<64x128xf32, #tpu.memory_space<vmem>>, vector<64x128xf32>,
    return
  }
  func.func @transform_0(%arg0: i32) -> (i32, i32) {
    %c0_i32 = arith.constant 0 : i32
    %c0_i32_0 = arith.constant 0 : i32
    return %arg0, %c0_i32 : i32, i32
  }
  func.func @transform_1(%arg0: i32) -> (i32, i32) {
    %c0_i32 = arith.constant 0 : i32
    %c0_i32_0 = arith.constant 0 : i32
    %c0_i32_1 = arith.constant 0 : i32
    return %c0_i32, %c0_i32_0 : i32, i32
  }
  func.func @transform_2(%arg0: i32) -> (i32, i32) {
    %c0_i32 = arith.constant 0 : i32
    %c0_i32_0 = arith.constant 0 : i32
    %c0_i32_1 = arith.constant 0 : i32
    return %c0_i32, %c0_i32_0 : i32, i32
  }
  func.func @transform_3(%arg0: i32) -> (i32, i32) {
    %c0_i32 = arith.constant 0 : i32
    %c0_i32_0 = arith.constant 0 : i32
    %c0_i32_1 = arith.constant 0 : i32
    return %c0_i32, %c0_i32_0 : i32, i32
  }
  func.func @transform_4(%arg0: i32) -> (i32, i32) {
    %c0_i32 = arith.constant 0 : i32
    %c0_i32_0 = arith.constant 0 : i32
    %c0_i32_1 = arith.constant 0 : i32
    return %c0_i32, %c0_i32_0 : i32, i32
  }
  func.func @transform_5(%arg0: i32) -> (i32, i32) {
    %c0_i32 = arith.constant 0 : i32
    %c0_i32_0 = arith.constant 0 : i32
    %c0_i32_1 = arith.constant 0 : i32
    return %c0_i32, %c0_i32_0 : i32, i32
  }
  func.func @transform_6(%arg0: i32) -> (i32, i32) {
    %c0_i32 = arith.constant 0 : i32
    %c0_i32_0 = arith.constant 0 : i32
    %c0_i32_1 = arith.constant 0 : i32
    return %c0_i32, %c0_i32_0 : i32, i32
  }
  func.func @transform_7(%arg0: i32) -> (i32, i32) {
    %c0_i32 = arith.constant 0 : i32
    %c0_i32_0 = arith.constant 0 : i32
    %c0_i32_1 = arith.constant 0 : i32
    return %c0_i32, %c0_i32_0 : i32, i32
  }
  func.func @transform_8(%arg0: i32) -> (i32, i32) {
    %c0_i32 = arith.constant 0 : i32
    %c0_i32_0 = arith.constant 0 : i32
    %c0_i32_1 = arith.constant 0 : i32
    return %c0_i32, %c0_i32_0 : i32, i32
  }
  func.func @transform_9(%arg0: i32) -> (i32, i32) {
    %c0_i32 = arith.constant 0 : i32
    %c0_i32_0 = arith.constant 0 : i32
    return %arg0, %c0_i32 : i32, i32
  }
}

</mosaic_0001>

<llo_original>
// kernel: dqn_forward.1
$region0: #{dqn_forward.1}
  #allocation0 [shape = 'u32[]', space=smem, size = 0x4, offset = 0x4, fixed_abs, tag = 'smem constant byte address 0x4 - core index']
  #allocation1 [shape = 'u32[144,128]{1,0:T(1,128)}', space=vmem, size = 0x12000, scoped, tag = 'internal scratch']
  %s0 = inlined_call_operand.vmem [shape: f32[64,32], index: 0, kind: input, shape index: {}]
  %s1 = inlined_call_operand.vmem [shape: f32[32,128], index: 1, kind: input, shape index: {}]
  %s2 = inlined_call_operand.vmem [shape: f32[1,128], index: 2, kind: input, shape index: {}]
  %s3 = inlined_call_operand.hbm [shape: f32[128,128], index: 3, kind: input, shape index: {}]
  %s4 = inlined_call_operand.vmem [shape: f32[1,128], index: 4, kind: input, shape index: {}]
  %s5 = inlined_call_operand.hbm [shape: f32[128,128], index: 5, kind: input, shape index: {}]
  %s6 = inlined_call_operand.vmem [shape: f32[1,128], index: 6, kind: input, shape index: {}]
  %s7 = inlined_call_operand.hbm [shape: f32[128,128], index: 7, kind: input, shape index: {}]
  %s8 = inlined_call_operand.vmem [shape: f32[1,128], index: 8, kind: input, shape index: {}]
  %s9 = inlined_call_operand.vmem [shape: f32[64,128], index: 9, kind: output, shape index: {}]
  %s10 = sld [smem:[#allocation0]]
  $region58: #{dqn_forward.1} parent=0
    _
  %s12 = ssub.s32 1, %s10
  %s13 = scalar_select 0, %s12, %s10
  $region1: #{dqn_forward.1} parent=0
    #allocation2 [shape = 'u8[65536]{0}', space=vmem, size = 0x10000, scoped, tag = 'input window, operand 3, single buffered']
    #allocation3 [shape = 's32[1]{0}', space=sflag, size = 0x4, scoped, tag = 'scoped memory for dqn_forward.1']
    #allocation4 [shape = 'u8[65536]{0}', space=vmem, size = 0x10000, scoped, tag = 'input window, operand 5, single buffered']
    #allocation5 [shape = 's32[1]{0}', space=sflag, size = 0x4, scoped, tag = 'scoped memory for dqn_forward.1']
    #allocation6 [shape = 'u8[65536]{0}', space=vmem, size = 0x10000, scoped, tag = 'input window, operand 7, single buffered']
    %14 = vsyncpa [#allocation3], 0
    %15 = vsyncpa [#allocation5], 0
    // Predicated region
    $region2: #{dqn_forward.1} parent=1 // pred_check
      _
    $region3: #{dqn_forward.1} parent=1 // pred_check_branch
      %17 = sbr.rel (0) target = $region5
    $region4: #{dqn_forward.1} parent=1 // pred_region
      _
    $region5: #{dqn_forward.1} parent=1 // pred_fallthru
      _
    // Predicated region
    $region6: #{dqn_forward.1} parent=1 // pred_check
      _
    $region7: #{dqn_forward.1} parent=1 // pred_check_branch
      %19 = sbr.rel (0) target = $region9
    $region8: #{dqn_forward.1} parent=1 // pred_region
      _
    $region9: #{dqn_forward.1} parent=1 // pred_fallthru
      _
    // Predicated region
    $region10: #{dqn_forward.1} parent=1 // pred_check
      _
    $region11: #{dqn_forward.1} parent=1 // pred_check_branch
      %21 = sbr.rel (0) target = $region13
    $region12: #{dqn_forward.1} parent=1 // pred_region
      _
    $region13: #{dqn_forward.1} parent=1 // pred_fallthru
      _
    // Predicated region
    $region14: #{dqn_forward.1} parent=1 // pred_check
      _
    $region15: #{dqn_forward.1} parent=1 // pred_check_branch
      %23 = sbr.rel (0) target = $region17
    $region16: #{dqn_forward.1} parent=1 // pred_region
      %s25 = ssub.s32 2048, 2048
      %26 = vsyncadd [#allocation3], %s25
      %s27 = sshll.u32 [#allocation2], 4
      %s28 = int_to_ptr.vmem [resolvable:$true] %s27
      %33 = dma.hbm_to_vmem [thread:$0]  %s3, 2048, %s28, [#allocation3], 128, 128, 8
    $region17: #{dqn_forward.1} parent=1 // pred_fallthru
      _
    // Predicated region
    $region18: #{dqn_forward.1} parent=1 // pred_check
      _
    $region19: #{dqn_forward.1} parent=1 // pred_check_branch
      %35 = sbr.rel (0) target = $region21
    $region20: #{dqn_forward.1} parent=1 // pred_region
      _
    $region21: #{dqn_forward.1} parent=1 // pred_fallthru
      _
    // Predicated region
    $region22: #{dqn_forward.1} parent=1 // pred_check
      _
    $region23: #{dqn_forward.1} parent=1 // pred_check_branch
      %37 = sbr.rel (0) target = $region25
    $region24: #{dqn_forward.1} parent=1 // pred_region
      %s39 = ssub.s32 2048, 2048
      %40 = vsyncadd [#allocation5], %s39
      %s41 = sshll.u32 [#allocation4], 4
      %s42 = int_to_ptr.vmem [resolvable:$true] %s41
      %47 = dma.hbm_to_vmem [thread:$0]  %s5, 2048, %s42, [#allocation5], 128, 128, 8
    $region25: #{dqn_forward.1} parent=1 // pred_fallthru
      _
    // Predicated region
    $region26: #{dqn_forward.1} parent=1 // pred_check
      _
    $region27: #{dqn_forward.1} parent=1 // pred_check_branch
      %49 = sbr.rel (0) target = $region29
    $region28: #{dqn_forward.1} parent=1 // pred_region
      _
    $region29: #{dqn_forward.1} parent=1 // pred_fallthru
      _
    // Predicated region
    $region30: #{dqn_forward.1} parent=1 // pred_check
      _
    $region31: #{dqn_forward.1} parent=1 // pred_check_branch
      %51 = sbr.rel (0) target = $region33
    $region32: #{dqn_forward.1} parent=1 // pred_region
      %s53 = ssub.s32 2048, 2048
      %54 = vsyncadd [#allocation5], %s53
      %s55 = sshll.u32 [#allocation6], 4
      %s56 = int_to_ptr.vmem [resolvable:$true] %s55
      %61 = dma.hbm_to_vmem [thread:$0]  %s7, 2048, %s56, [#allocation5], 128, 128, 8
    $region33: #{dqn_forward.1} parent=1 // pred_fallthru
      _
    // Predicated region
    $region34: #{dqn_forward.1} parent=1 // pred_check
      _
    $region35: #{dqn_forward.1} parent=1 // pred_check_branch
      %63 = sbr.rel (0) target = $region37
    $region36: #{dqn_forward.1} parent=1 // pred_region
      _
    $region37: #{dqn_forward.1} parent=1 // pred_fallthru
      _
    // Predicated region
    $region38: #{dqn_forward.1} parent=1 // pred_check
      _
    $region39: #{dqn_forward.1} parent=1 // pred_check_branch
      %65 = sbr.rel (0) target = $region41
    $region40: #{dqn_forward.1} parent=1 // pred_region
      %66 = dma.done [#allocation3], 2048
    $region41: #{dqn_forward.1} parent=1 // pred_fallthru
      _
    // Predicated region
    $region42: #{dqn_forward.1} parent=1 // pred_check
      _
    $region43: #{dqn_forward.1} parent=1 // pred_check_branch
      %68 = sbr.rel (0) target = $region45
    $region44: #{dqn_forward.1} parent=1 // pred_region
      %69 = dma.done [#allocation5], 2048
    $region45: #{dqn_forward.1} parent=1 // pred_fallthru
      _
    // Predicated region
    $region46: #{dqn_forward.1} parent=1 // pred_check
      _
    $region47: #{dqn_forward.1} parent=1 // pred_check_branch
      %71 = sbr.rel (0) target = $region49
    $region48: #{dqn_forward.1} parent=1 // pred_region
      %72 = dma.done [#allocation5], 2048
    $region49: #{dqn_forward.1} parent=1 // pred_fallthru
      _
    %v73 = vld [vmem:[%s0] sm:$0xff]
    %v74 = vld [vmem:[%s0 + $0x8] sm:$0xff]
    %v75 = vld [vmem:[%s0 + $0x10] sm:$0xff]
    %v76 = vld [vmem:[%s0 + $0x18] sm:$0xff]
    %v77 = vld [vmem:[%s0 + $0x20] sm:$0xff]
    %v78 = vld [vmem:[%s0 + $0x28] sm:$0xff]
    %v79 = vld [vmem:[%s0 + $0x30] sm:$0xff]
    %v80 = vld [vmem:[%s0 + $0x38] sm:$0xff]
    %v81 = vld [vmem:[%s1] sm:$0xff]
    %v82 = vld [vmem:[%s1 + $0x8] sm:$0xff]
    %v83 = vld [vmem:[%s1 + $0x10] sm:$0xff]
    %v84 = vld [vmem:[%s1 + $0x18] sm:$0xff]
    %v85 = vld [vmem:[%s2] sm:$0x1]
    %v87 = vlaneseq
    %v88 = vshrl.u32 %v87, 7
    %v89 = vsub.s32 0, %v88
    %v90 = vrot.slane %v85, %v89
    %vm92 = vcmask 261120
    %v94 = vsel %vm92, %v73, 0
    %v97 = vsel %vm92, %v74, 0
    %v100 = vsel %vm92, %v75, 0
    %v103 = vsel %vm92, %v76, 0
    %v106 = vsel %vm92, %v77, 0
    %v109 = vsel %vm92, %v78, 0
    %v112 = vsel %vm92, %v79, 0
    %v115 = vsel %vm92, %v80, 0
    %117 = vmatprep.subr.mxu0 0.0
    %118 = vmatpush1.msra.mxu0 %v81
    %119 = vmatprep.subr.mxu0 0.0
    %120 = vmatpush1.msra.mxu0 %v82
    %121 = vmatprep.subr.mxu0 0.0
    %122 = vmatpush1.msra.mxu0 %v83
    %123 = vmatprep.subr.mxu0 0.0
    %124 = vmatpush1.msra.mxu0 %v84
    %125 = vmatprep.subr.mxu0 0.0
    %126 = vmatpush1.msra.mxu0 0.0
    %127 = vmatprep.subr.mxu0 0.0
    %128 = vmatpush1.msra.mxu0 0.0
    %129 = vmatprep.subr.mxu0 0.0
    %130 = vmatpush1.msra.mxu0 0.0
    %131 = vmatprep.subr.mxu0 0.0
    %132 = vmatpush1.msra.mxu0 0.0
    %133 = vmatprep.subr.mxu0 0.0
    %134 = vmatpush1.msra.mxu0 0.0
    %135 = vmatprep.subr.mxu0 0.0
    %136 = vmatpush1.msra.mxu0 0.0
    %137 = vmatprep.subr.mxu0 0.0
    %138 = vmatpush1.msra.mxu0 0.0
    %139 = vmatprep.subr.mxu0 0.0
    %140 = vmatpush1.msra.mxu0 0.0
    %141 = vmatprep.subr.mxu0 0.0
    %142 = vmatpush1.msra.mxu0 0.0
    %143 = vmatprep.subr.mxu0 0.0
    %144 = vmatpush1.msra.mxu0 0.0
    %145 = vmatprep.subr.mxu0 0.0
    %146 = vmatpush1.msra.mxu0 0.0
    %147 = vmatprep.subr.mxu0 0.0
    %148 = vmatpush1.msra.mxu0 0.0
    %149 = vmatprep.subr.mxu0 0.0
    %150 = vmatpush1.msra.mxu0 0.0
    %151 = vmatprep.subr.mxu0 0.0
    %152 = vmatpush1.msra.mxu0 0.0
    %153 = vmatprep.subr.mxu0 0.0
    %154 = vmatpush1.msra.mxu0 0.0
    %155 = vmatprep.subr.mxu0 0.0
    %156 = vmatpush1.msra.mxu0 0.0
    %157 = vmatprep.subr.mxu0 0.0
    %158 = vmatpush1.msra.mxu0 0.0
    %159 = vmatprep.subr.mxu0 0.0
    %160 = vmatpush1.msra.mxu0 0.0
    %161 = vmatprep.subr.mxu0 0.0
    %162 = vmatpush1.msra.mxu0 0.0
    %163 = vmatprep.subr.mxu0 0.0
    %164 = vmatpush1.msra.mxu0 0.0
    %165 = vmatprep.subr.mxu0 0.0
    %166 = vmatpush1.msra.mxu0 0.0
    %167 = vmatprep.subr.mxu0 0.0
    %168 = vmatpush1.msra.mxu0 0.0
    %169 = vmatprep.subr.mxu0 0.0
    %170 = vmatpush1.msra.mxu0 0.0
    %171 = vmatprep.subr.mxu0 0.0
    %172 = vmatpush1.msra.mxu0 0.0
    %173 = vmatprep.subr.mxu0 0.0
    %174 = vmatpush1.msra.mxu0 0.0
    %175 = vmatprep.subr.mxu0 0.0
    %176 = vmatpush1.msra.mxu0 0.0
    %177 = vmatprep.subr.mxu0 0.0
    %178 = vmatpush1.msra.mxu0 0.0
    %179 = vmatprep.subr.mxu0 0.0
    %180 = vmatpush1.msra.mxu0 0.0
    %181 = vmatprep.mubr.f32.mxu0 0.0
    %182 = vmatmul.mubr.f32.gmra.mrb[0].mxu0 %v94
    %v183 = vpop.f32.mrb[0].mxu0
    %v184 = vadd.f32 %v90, %v183
    %v185 = vpop.f32.mrb[0].mxu0
    %186 = vmatprep.mubr.f32.mxu0 0.0
    %187 = vmatmul.mubr.f32.gmra.mrb[0].mxu0 %v97
    %v188 = vpop.f32.mrb[0].mxu0
    %v189 = vadd.f32 %v90, %v188
    %v190 = vpop.f32.mrb[0].mxu0
    %191 = vmatprep.mubr.f32.mxu0 0.0
    %192 = vmatmul.mubr.f32.gmra.mrb[0].mxu0 %v100
    %v193 = vpop.f32.mrb[0].mxu0
    %v194 = vadd.f32 %v90, %v193
    %v195 = vpop.f32.mrb[0].mxu0
    %196 = vmatprep.mubr.f32.mxu0 0.0
    %197 = vmatmul.mubr.f32.gmra.mrb[0].mxu0 %v103
    %v198 = vpop.f32.mrb[0].mxu0
    %v199 = vadd.f32 %v90, %v198
    %v200 = vpop.f32.mrb[0].mxu0
    %201 = vmatprep.mubr.f32.mxu0 0.0
    %202 = vmatmul.mubr.f32.gmra.mrb[0].mxu0 %v106
    %v203 = vpop.f32.mrb[0].mxu0
    %v204 = vadd.f32 %v90, %v203
    %v205 = vpop.f32.mrb[0].mxu0
    %206 = vmatprep.mubr.f32.mxu0 0.0
    %207 = vmatmul.mubr.f32.gmra.mrb[0].mxu0 %v109
    %v208 = vpop.f32.mrb[0].mxu0
    %v209 = vadd.f32 %v90, %v208
    %v210 = vpop.f32.mrb[0].mxu0
    %211 = vmatprep.mubr.f32.mxu0 0.0
    %212 = vmatmul.mubr.f32.gmra.mrb[0].mxu0 %v112
    %v213 = vpop.f32.mrb[0].mxu0
    %v214 = vadd.f32 %v90, %v213
    %v215 = vpop.f32.mrb[0].mxu0
    %216 = vmatprep.mubr.f32.mxu0 0.0
    %217 = vmatmul.mubr.f32.gmra.mrb[0].mxu0 %v115
    %v218 = vpop.f32.mrb[0].mxu0
    %v219 = vadd.f32 %v90, %v218
    %v220 = vpop.f32.mrb[0].mxu0
    %221 = vdwg.mxu0
    %vm222 = vcmp.ge.f32.partialorder %v184, 0.0
    %vm223 = vcmp.ge.f32.partialorder %v189, 0.0
    %vm224 = vcmp.ge.f32.partialorder %v194, 0.0
    %vm225 = vcmp.ge.f32.partialorder %v199, 0.0
    %vm226 = vcmp.ge.f32.partialorder %v204, 0.0
    %vm227 = vcmp.ge.f32.partialorder %v209, 0.0
    %vm228 = vcmp.ge.f32.partialorder %v214, 0.0
    %vm229 = vcmp.ge.f32.partialorder %v219, 0.0
    %v230 = vmul.f32 %v184, 0.01
    %v231 = vmul.f32 %v189, 0.01
    %v232 = vmul.f32 %v194, 0.01
    %v233 = vmul.f32 %v199, 0.01
    %v234 = vmul.f32 %v204, 0.01
    %v235 = vmul.f32 %v209, 0.01
    %v236 = vmul.f32 %v214, 0.01
    %v237 = vmul.f32 %v219, 0.01
    %v238 = vsel %vm222, %v184, %v230
    %v239 = vsel %vm223, %v189, %v231
    %v240 = vsel %vm224, %v194, %v232
    %v241 = vsel %vm225, %v199, %v233
    %v242 = vsel %vm226, %v204, %v234
    %v243 = vsel %vm227, %v209, %v235
    %v244 = vsel %vm228, %v214, %v236
    %v245 = vsel %vm229, %v219, %v237
    %v246 = vld [vmem:[#allocation2] sm:$0xff]
    %v247 = vld [vmem:[#allocation2 + $0x8] sm:$0xff]
    %v248 = vld [vmem:[#allocation2 + $0x10] sm:$0xff]
    %v249 = vld [vmem:[#allocation2 + $0x18] sm:$0xff]
    %v250 = vld [vmem:[#allocation2 + $0x20] sm:$0xff]
    %v251 = vld [vmem:[#allocation2 + $0x28] sm:$0xff]
    %v252 = vld [vmem:[#allocation2 + $0x30] sm:$0xff]
    %v253 = vld [vmem:[#allocation2 + $0x38] sm:$0xff]
    %v254 = vld [vmem:[#allocation2 + $0x40] sm:$0xff]
    %v255 = vld [vmem:[#allocation2 + $0x48] sm:$0xff]
    %v256 = vld [vmem:[#allocation2 + $0x50] sm:$0xff]
    %v257 = vld [vmem:[#allocation2 + $0x58] sm:$0xff]
    %v258 = vld [vmem:[#allocation2 + $0x60] sm:$0xff]
    %v259 = vld [vmem:[#allocation2 + $0x68] sm:$0xff]
    %v260 = vld [vmem:[#allocation2 + $0x70] sm:$0xff]
    %v261 = vld [vmem:[#allocation2 + $0x78] sm:$0xff]
    %v262 = vld [vmem:[%s4] sm:$0x1]
    %v264 = vlaneseq
    %v265 = vshrl.u32 %v264, 7
    %v266 = vsub.s32 0, %v265
    %v267 = vrot.slane %v262, %v266
    %269 = vmatprep.subr.mxu0 0.0
    %270 = vmatpush1.msra.mxu0 %v246
    %271 = vmatprep.subr.mxu0 0.0
    %272 = vmatpush1.msra.mxu0 %v247
    %273 = vmatprep.subr.mxu0 0.0
    %274 = vmatpush1.msra.mxu0 %v248
    %275 = vmatprep.subr.mxu0 0.0
    %276 = vmatpush1.msra.mxu0 %v249
    %277 = vmatprep.subr.mxu0 0.0
    %278 = vmatpush1.msra.mxu0 %v250
    %279 = vmatprep.subr.mxu0 0.0
    %280 = vmatpush1.msra.mxu0 %v251
    %281 = vmatprep.subr.mxu0 0.0
    %282 = vmatpush1.msra.mxu0 %v252
    %283 = vmatprep.subr.mxu0 0.0
    %284 = vmatpush1.msra.mxu0 %v253
    %285 = vmatprep.subr.mxu0 0.0
    %286 = vmatpush1.msra.mxu0 %v254
    %287 = vmatprep.subr.mxu0 0.0
    %288 = vmatpush1.msra.mxu0 %v255
    %289 = vmatprep.subr.mxu0 0.0
    %290 = vmatpush1.msra.mxu0 %v256
    %291 = vmatprep.subr.mxu0 0.0
    %292 = vmatpush1.msra.mxu0 %v257
    %293 = vmatprep.subr.mxu0 0.0
    %294 = vmatpush1.msra.mxu0 %v258
    %295 = vmatprep.subr.mxu0 0.0
    %296 = vmatpush1.msra.mxu0 %v259
    %297 = vmatprep.subr.mxu0 0.0
    %298 = vmatpush1.msra.mxu0 %v260
    %299 = vmatprep.subr.mxu0 0.0
    %300 = vmatpush1.msra.mxu0 %v261
    %301 = vmatprep.subr.mxu0 0.0
    %302 = vmatpush1.msra.mxu0 0.0
    %303 = vmatprep.subr.mxu0 0.0
    %304 = vmatpush1.msra.mxu0 0.0
    %305 = vmatprep.subr.mxu0 0.0
    %306 = vmatpush1.msra.mxu0 0.0
    %307 = vmatprep.subr.mxu0 0.0
    %308 = vmatpush1.msra.mxu0 0.0
    %309 = vmatprep.subr.mxu0 0.0
    %310 = vmatpush1.msra.mxu0 0.0
    %311 = vmatprep.subr.mxu0 0.0
    %312 = vmatpush1.msra.mxu0 0.0
    %313 = vmatprep.subr.mxu0 0.0
    %314 = vmatpush1.msra.mxu0 0.0
    %315 = vmatprep.subr.mxu0 0.0
    %316 = vmatpush1.msra.mxu0 0.0
    %317 = vmatprep.subr.mxu0 0.0
    %318 = vmatpush1.msra.mxu0 0.0
    %319 = vmatprep.subr.mxu0 0.0
    %320 = vmatpush1.msra.mxu0 0.0
    %321 = vmatprep.subr.mxu0 0.0
    %322 = vmatpush1.msra.mxu0 0.0
    %323 = vmatprep.subr.mxu0 0.0
    %324 = vmatpush1.msra.mxu0 0.0
    %325 = vmatprep.subr.mxu0 0.0
    %326 = vmatpush1.msra.mxu0 0.0
    %327 = vmatprep.subr.mxu0 0.0
    %328 = vmatpush1.msra.mxu0 0.0
    %329 = vmatprep.subr.mxu0 0.0
    %330 = vmatpush1.msra.mxu0 0.0
    %331 = vmatprep.subr.mxu0 0.0
    %332 = vmatpush1.msra.mxu0 0.0
    %333 = vmatprep.mubr.f32.mxu0 0.0
    %334 = vmatmul.mubr.f32.gmra.mrb[0].mxu0 %v238
    %v335 = vpop.f32.mrb[0].mxu0
    %v336 = vadd.f32 %v267, %v335
    %v337 = vpop.f32.mrb[0].mxu0
    %338 = vmatprep.mubr.f32.mxu0 0.0
    %339 = vmatmul.mubr.f32.gmra.mrb[0].mxu0 %v239
    %v340 = vpop.f32.mrb[0].mxu0
    %v341 = vadd.f32 %v267, %v340
    %v342 = vpop.f32.mrb[0].mxu0
    %343 = vmatprep.mubr.f32.mxu0 0.0
    %344 = vmatmul.mubr.f32.gmra.mrb[0].mxu0 %v240
    %v345 = vpop.f32.mrb[0].mxu0
    %v346 = vadd.f32 %v267, %v345
    %v347 = vpop.f32.mrb[0].mxu0
    %348 = vmatprep.mubr.f32.mxu0 0.0
    %349 = vmatmul.mubr.f32.gmra.mrb[0].mxu0 %v241
    %v350 = vpop.f32.mrb[0].mxu0
    %v351 = vadd.f32 %v267, %v350
    %v352 = vpop.f32.mrb[0].mxu0
    %353 = vmatprep.mubr.f32.mxu0 0.0
    %354 = vmatmul.mubr.f32.gmra.mrb[0].mxu0 %v242
    %v355 = vpop.f32.mrb[0].mxu0
    %v356 = vadd.f32 %v267, %v355
    %v357 = vpop.f32.mrb[0].mxu0
    %358 = vmatprep.mubr.f32.mxu0 0.0
    %359 = vmatmul.mubr.f32.gmra.mrb[0].mxu0 %v243
    %v360 = vpop.f32.mrb[0].mxu0
    %v361 = vadd.f32 %v267, %v360
    %v362 = vpop.f32.mrb[0].mxu0
    %363 = vmatprep.mubr.f32.mxu0 0.0
    %364 = vmatmul.mubr.f32.gmra.mrb[0].mxu0 %v244
    %v365 = vpop.f32.mrb[0].mxu0
    %v366 = vadd.f32 %v267, %v365
    %v367 = vpop.f32.mrb[0].mxu0
    %368 = vmatprep.mubr.f32.mxu0 0.0
    %369 = vmatmul.mubr.f32.gmra.mrb[0].mxu0 %v245
    %v370 = vpop.f32.mrb[0].mxu0
    %v371 = vadd.f32 %v267, %v370
    %v372 = vpop.f32.mrb[0].mxu0
    %373 = vdwg.mxu0
    %vm374 = vcmp.ge.f32.partialorder %v336, 0.0
    %vm375 = vcmp.ge.f32.partialorder %v341, 0.0
    %vm376 = vcmp.ge.f32.partialorder %v346, 0.0
    %vm377 = vcmp.ge.f32.partialorder %v351, 0.0
    %vm378 = vcmp.ge.f32.partialorder %v356, 0.0
    %vm379 = vcmp.ge.f32.partialorder %v361, 0.0
    %vm380 = vcmp.ge.f32.partialorder %v366, 0.0
    %vm381 = vcmp.ge.f32.partialorder %v371, 0.0
    %v382 = vmul.f32 %v336, 0.01
    %v383 = vmul.f32 %v341, 0.01
    %v384 = vmul.f32 %v346, 0.01
    %v385 = vmul.f32 %v351, 0.01
    %v386 = vmul.f32 %v356, 0.01
    %v387 = vmul.f32 %v361, 0.01
    %v388 = vmul.f32 %v366, 0.01
    %v389 = vmul.f32 %v371, 0.01
    %v390 = vsel %vm374, %v336, %v382
    %v391 = vsel %vm375, %v341, %v383
    %v392 = vsel %vm376, %v346, %v384
    %v393 = vsel %vm377, %v351, %v385
    %v394 = vsel %vm378, %v356, %v386
    %v395 = vsel %vm379, %v361, %v387
    %v396 = vsel %vm380, %v366, %v388
    %v397 = vsel %vm381, %v371, %v389
    %v398 = vld [vmem:[#allocation4] sm:$0xff]
    %v399 = vld [vmem:[#allocation4 + $0x8] sm:$0xff]
    %v400 = vld [vmem:[#allocation4 + $0x10] sm:$0xff]
    %v401 = vld [vmem:[#allocation4 + $0x18] sm:$0xff]
    %v402 = vld [vmem:[#allocation4 + $0x20] sm:$0xff]
    %v403 = vld [vmem:[#allocation4 + $0x28] sm:$0xff]
    %v404 = vld [vmem:[#allocation4 + $0x30] sm:$0xff]
    %v405 = vld [vmem:[#allocation4 + $0x38] sm:$0xff]
    %v406 = vld [vmem:[#allocation4 + $0x40] sm:$0xff]
    %v407 = vld [vmem:[#allocation4 + $0x48] sm:$0xff]
    %v408 = vld [vmem:[#allocation4 + $0x50] sm:$0xff]
    %v409 = vld [vmem:[#allocation4 + $0x58] sm:$0xff]
    %v410 = vld [vmem:[#allocation4 + $0x60] sm:$0xff]
    %v411 = vld [vmem:[#allocation4 + $0x68] sm:$0xff]
    %v412 = vld [vmem:[#allocation4 + $0x70] sm:$0xff]
    %v413 = vld [vmem:[#allocation4 + $0x78] sm:$0xff]
    %v414 = vld [vmem:[%s6] sm:$0x1]
    %v416 = vlaneseq
    %v417 = vshrl.u32 %v416, 7
    %v418 = vsub.s32 0, %v417
    %v419 = vrot.slane %v414, %v418
    %421 = vmatprep.subr.mxu0 0.0
    %422 = vmatpush1.msra.mxu0 %v398
    %423 = vmatprep.subr.mxu0 0.0
    %424 = vmatpush1.msra.mxu0 %v399
    %425 = vmatprep.subr.mxu0 0.0
    %426 = vmatpush1.msra.mxu0 %v400
    %427 = vmatprep.subr.mxu0 0.0
    %428 = vmatpush1.msra.mxu0 %v401
    %429 = vmatprep.subr.mxu0 0.0
    %430 = vmatpush1.msra.mxu0 %v402
    %431 = vmatprep.subr.mxu0 0.0
    %432 = vmatpush1.msra.mxu0 %v403
    %433 = vmatprep.subr.mxu0 0.0
    %434 = vmatpush1.msra.mxu0 %v404
    %435 = vmatprep.subr.mxu0 0.0
    %436 = vmatpush1.msra.mxu0 %v405
    %437 = vmatprep.subr.mxu0 0.0
    %438 = vmatpush1.msra.mxu0 %v406
    %439 = vmatprep.subr.mxu0 0.0
    %440 = vmatpush1.msra.mxu0 %v407
    %441 = vmatprep.subr.mxu0 0.0
    %442 = vmatpush1.msra.mxu0 %v408
    %443 = vmatprep.subr.mxu0 0.0
    %444 = vmatpush1.msra.mxu0 %v409
    %445 = vmatprep.subr.mxu0 0.0
    %446 = vmatpush1.msra.mxu0 %v410
    %447 = vmatprep.subr.mxu0 0.0
    %448 = vmatpush1.msra.mxu0 %v411
    %449 = vmatprep.subr.mxu0 0.0
    %450 = vmatpush1.msra.mxu0 %v412
    %451 = vmatprep.subr.mxu0 0.0
    %452 = vmatpush1.msra.mxu0 %v413
    %453 = vmatprep.subr.mxu0 0.0
    %454 = vmatpush1.msra.mxu0 0.0
    %455 = vmatprep.subr.mxu0 0.0
    %456 = vmatpush1.msra.mxu0 0.0
    %457 = vmatprep.subr.mxu0 0.0
    %458 = vmatpush1.msra.mxu0 0.0
    %459 = vmatprep.subr.mxu0 0.0
    %460 = vmatpush1.msra.mxu0 0.0
    %461 = vmatprep.subr.mxu0 0.0
    %462 = vmatpush1.msra.mxu0 0.0
    %463 = vmatprep.subr.mxu0 0.0
    %464 = vmatpush1.msra.mxu0 0.0
    %465 = vmatprep.subr.mxu0 0.0
    %466 = vmatpush1.msra.mxu0 0.0
    %467 = vmatprep.subr.mxu0 0.0
    %468 = vmatpush1.msra.mxu0 0.0
    %469 = vmatprep.subr.mxu0 0.0
    %470 = vmatpush1.msra.mxu0 0.0
    %471 = vmatprep.subr.mxu0 0.0
    %472 = vmatpush1.msra.mxu0 0.0
    %473 = vmatprep.subr.mxu0 0.0
    %474 = vmatpush1.msra.mxu0 0.0
    %475 = vmatprep.subr.mxu0 0.0
    %476 = vmatpush1.msra.mxu0 0.0
    %477 = vmatprep.subr.mxu0 0.0
    %478 = vmatpush1.msra.mxu0 0.0
    %479 = vmatprep.subr.mxu0 0.0
    %480 = vmatpush1.msra.mxu0 0.0
    %481 = vmatprep.subr.mxu0 0.0
    %482 = vmatpush1.msra.mxu0 0.0
    %483 = vmatprep.subr.mxu0 0.0
    %484 = vmatpush1.msra.mxu0 0.0
    %485 = vmatprep.mubr.f32.mxu0 0.0
    %486 = vmatmul.mubr.f32.gmra.mrb[0].mxu0 %v390
    %v487 = vpop.f32.mrb[0].mxu0
    %v488 = vadd.f32 %v419, %v487
    %v489 = vpop.f32.mrb[0].mxu0
    %490 = vmatprep.mubr.f32.mxu0 0.0
    %491 = vmatmul.mubr.f32.gmra.mrb[0].mxu0 %v391
    %v492 = vpop.f32.mrb[0].mxu0
    %v493 = vadd.f32 %v419, %v492
    %v494 = vpop.f32.mrb[0].mxu0
    %495 = vmatprep.mubr.f32.mxu0 0.0
    %496 = vmatmul.mubr.f32.gmra.mrb[0].mxu0 %v392
    %v497 = vpop.f32.mrb[0].mxu0
    %v498 = vadd.f32 %v419, %v497
    %v499 = vpop.f32.mrb[0].mxu0
    %500 = vmatprep.mubr.f32.mxu0 0.0
    %501 = vmatmul.mubr.f32.gmra.mrb[0].mxu0 %v393
    %v502 = vpop.f32.mrb[0].mxu0
    %v503 = vadd.f32 %v419, %v502
    %v504 = vpop.f32.mrb[0].mxu0
    %505 = vmatprep.mubr.f32.mxu0 0.0
    %506 = vmatmul.mubr.f32.gmra.mrb[0].mxu0 %v394
    %v507 = vpop.f32.mrb[0].mxu0
    %v508 = vadd.f32 %v419, %v507
    %v509 = vpop.f32.mrb[0].mxu0
    %510 = vmatprep.mubr.f32.mxu0 0.0
    %511 = vmatmul.mubr.f32.gmra.mrb[0].mxu0 %v395
    %v512 = vpop.f32.mrb[0].mxu0
    %v513 = vadd.f32 %v419, %v512
    %v514 = vpop.f32.mrb[0].mxu0
    %515 = vmatprep.mubr.f32.mxu0 0.0
    %516 = vmatmul.mubr.f32.gmra.mrb[0].mxu0 %v396
    %v517 = vpop.f32.mrb[0].mxu0
    %v518 = vadd.f32 %v419, %v517
    %v519 = vpop.f32.mrb[0].mxu0
    %520 = vmatprep.mubr.f32.mxu0 0.0
    %521 = vmatmul.mubr.f32.gmra.mrb[0].mxu0 %v397
    %v522 = vpop.f32.mrb[0].mxu0
    %v523 = vadd.f32 %v419, %v522
    %v524 = vpop.f32.mrb[0].mxu0
    %525 = vdwg.mxu0
    %vm526 = vcmp.ge.f32.partialorder %v488, 0.0
    %vm527 = vcmp.ge.f32.partialorder %v493, 0.0
    %vm528 = vcmp.ge.f32.partialorder %v498, 0.0
    %vm529 = vcmp.ge.f32.partialorder %v503, 0.0
    %vm530 = vcmp.ge.f32.partialorder %v508, 0.0
    %vm531 = vcmp.ge.f32.partialorder %v513, 0.0
    %vm532 = vcmp.ge.f32.partialorder %v518, 0.0
    %vm533 = vcmp.ge.f32.partialorder %v523, 0.0
    %v534 = vmul.f32 %v488, 0.01
    %v535 = vmul.f32 %v493, 0.01
    %v536 = vmul.f32 %v498, 0.01
    %v537 = vmul.f32 %v503, 0.01
    %v538 = vmul.f32 %v508, 0.01
    %v539 = vmul.f32 %v513, 0.01
    %v540 = vmul.f32 %v518, 0.01
    %v541 = vmul.f32 %v523, 0.01
    %v542 = vsel %vm526, %v488, %v534
    %v543 = vsel %vm527, %v493, %v535
    %v544 = vsel %vm528, %v498, %v536
    %v545 = vsel %vm529, %v503, %v537
    %v546 = vsel %vm530, %v508, %v538
    %v547 = vsel %vm531, %v513, %v539
    %v548 = vsel %vm532, %v518, %v540
    %v549 = vsel %vm533, %v523, %v541
    %v550 = vld [vmem:[#allocation6] sm:$0xff]
    %v551 = vld [vmem:[#allocation6 + $0x8] sm:$0xff]
    %v552 = vld [vmem:[#allocation6 + $0x10] sm:$0xff]
    %v553 = vld [vmem:[#allocation6 + $0x18] sm:$0xff]
    %v554 = vld [vmem:[#allocation6 + $0x20] sm:$0xff]
    %v555 = vld [vmem:[#allocation6 + $0x28] sm:$0xff]
    %v556 = vld [vmem:[#allocation6 + $0x30] sm:$0xff]
    %v557 = vld [vmem:[#allocation6 + $0x38] sm:$0xff]
    %v558 = vld [vmem:[#allocation6 + $0x40] sm:$0xff]
    %v559 = vld [vmem:[#allocation6 + $0x48] sm:$0xff]
    %v560 = vld [vmem:[#allocation6 + $0x50] sm:$0xff]
    %v561 = vld [vmem:[#allocation6 + $0x58] sm:$0xff]
    %v562 = vld [vmem:[#allocation6 + $0x60] sm:$0xff]
    %v563 = vld [vmem:[#allocation6 + $0x68] sm:$0xff]
    %v564 = vld [vmem:[#allocation6 + $0x70] sm:$0xff]
    %v565 = vld [vmem:[#allocation6 + $0x78] sm:$0xff]
    %v566 = vld [vmem:[%s8] sm:$0x1]
    %v568 = vlaneseq
    %v569 = vshrl.u32 %v568, 7
    %v570 = vsub.s32 0, %v569
    %v571 = vrot.slane %v566, %v570
    %573 = vmatprep.subr.mxu0 0.0
    %574 = vmatpush1.msra.mxu0 %v550
    %575 = vmatprep.subr.mxu0 0.0
    %576 = vmatpush1.msra.mxu0 %v551
    %577 = vmatprep.subr.mxu0 0.0
    %578 = vmatpush1.msra.mxu0 %v552
    %579 = vmatprep.subr.mxu0 0.0
    %580 = vmatpush1.msra.mxu0 %v553
    %581 = vmatprep.subr.mxu0 0.0
    %582 = vmatpush1.msra.mxu0 %v554
    %583 = vmatprep.subr.mxu0 0.0
    %584 = vmatpush1.msra.mxu0 %v555
    %585 = vmatprep.subr.mxu0 0.0
    %586 = vmatpush1.msra.mxu0 %v556
    %587 = vmatprep.subr.mxu0 0.0
    %588 = vmatpush1.msra.mxu0 %v557
    %589 = vmatprep.subr.mxu0 0.0
    %590 = vmatpush1.msra.mxu0 %v558
    %591 = vmatprep.subr.mxu0 0.0
    %592 = vmatpush1.msra.mxu0 %v559
    %593 = vmatprep.subr.mxu0 0.0
    %594 = vmatpush1.msra.mxu0 %v560
    %595 = vmatprep.subr.mxu0 0.0
    %596 = vmatpush1.msra.mxu0 %v561
    %597 = vmatprep.subr.mxu0 0.0
    %598 = vmatpush1.msra.mxu0 %v562
    %599 = vmatprep.subr.mxu0 0.0
    %600 = vmatpush1.msra.mxu0 %v563
    %601 = vmatprep.subr.mxu0 0.0
    %602 = vmatpush1.msra.mxu0 %v564
    %603 = vmatprep.subr.mxu0 0.0
    %604 = vmatpush1.msra.mxu0 %v565
    %605 = vmatprep.subr.mxu0 0.0
    %606 = vmatpush1.msra.mxu0 0.0
    %607 = vmatprep.subr.mxu0 0.0
    %608 = vmatpush1.msra.mxu0 0.0
    %609 = vmatprep.subr.mxu0 0.0
    %610 = vmatpush1.msra.mxu0 0.0
    %611 = vmatprep.subr.mxu0 0.0
    %612 = vmatpush1.msra.mxu0 0.0
    %613 = vmatprep.subr.mxu0 0.0
    %614 = vmatpush1.msra.mxu0 0.0
    %615 = vmatprep.subr.mxu0 0.0
    %616 = vmatpush1.msra.mxu0 0.0
    %617 = vmatprep.subr.mxu0 0.0
    %618 = vmatpush1.msra.mxu0 0.0
    %619 = vmatprep.subr.mxu0 0.0
    %620 = vmatpush1.msra.mxu0 0.0
    %621 = vmatprep.subr.mxu0 0.0
    %622 = vmatpush1.msra.mxu0 0.0
    %623 = vmatprep.subr.mxu0 0.0
    %624 = vmatpush1.msra.mxu0 0.0
    %625 = vmatprep.subr.mxu0 0.0
    %626 = vmatpush1.msra.mxu0 0.0
    %627 = vmatprep.subr.mxu0 0.0
    %628 = vmatpush1.msra.mxu0 0.0
    %629 = vmatprep.subr.mxu0 0.0
    %630 = vmatpush1.msra.mxu0 0.0
    %631 = vmatprep.subr.mxu0 0.0
    %632 = vmatpush1.msra.mxu0 0.0
    %633 = vmatprep.subr.mxu0 0.0
    %634 = vmatpush1.msra.mxu0 0.0
    %635 = vmatprep.subr.mxu0 0.0
    %636 = vmatpush1.msra.mxu0 0.0
    %637 = vmatprep.mubr.f32.mxu0 0.0
    %638 = vmatmul.mubr.f32.gmra.mrb[0].mxu0 %v542
    %v639 = vpop.f32.mrb[0].mxu0
    %v640 = vadd.f32 %v571, %v639
    %v641 = vpop.f32.mrb[0].mxu0
    %642 = vmatprep.mubr.f32.mxu0 0.0
    %643 = vmatmul.mubr.f32.gmra.mrb[0].mxu0 %v543
    %v644 = vpop.f32.mrb[0].mxu0
    %v645 = vadd.f32 %v571, %v644
    %v646 = vpop.f32.mrb[0].mxu0
    %647 = vmatprep.mubr.f32.mxu0 0.0
    %648 = vmatmul.mubr.f32.gmra.mrb[0].mxu0 %v544
    %v649 = vpop.f32.mrb[0].mxu0
    %v650 = vadd.f32 %v571, %v649
    %v651 = vpop.f32.mrb[0].mxu0
    %652 = vmatprep.mubr.f32.mxu0 0.0
    %653 = vmatmul.mubr.f32.gmra.mrb[0].mxu0 %v545
    %v654 = vpop.f32.mrb[0].mxu0
    %v655 = vadd.f32 %v571, %v654
    %v656 = vpop.f32.mrb[0].mxu0
    %657 = vmatprep.mubr.f32.mxu0 0.0
    %658 = vmatmul.mubr.f32.gmra.mrb[0].mxu0 %v546
    %v659 = vpop.f32.mrb[0].mxu0
    %v660 = vadd.f32 %v571, %v659
    %v661 = vpop.f32.mrb[0].mxu0
    %662 = vmatprep.mubr.f32.mxu0 0.0
    %663 = vmatmul.mubr.f32.gmra.mrb[0].mxu0 %v547
    %v664 = vpop.f32.mrb[0].mxu0
    %v665 = vadd.f32 %v571, %v664
    %v666 = vpop.f32.mrb[0].mxu0
    %667 = vmatprep.mubr.f32.mxu0 0.0
    %668 = vmatmul.mubr.f32.gmra.mrb[0].mxu0 %v548
    %v669 = vpop.f32.mrb[0].mxu0
    %v670 = vadd.f32 %v571, %v669
    %v671 = vpop.f32.mrb[0].mxu0
    %672 = vmatprep.mubr.f32.mxu0 0.0
    %673 = vmatmul.mubr.f32.gmra.mrb[0].mxu0 %v549
    %v674 = vpop.f32.mrb[0].mxu0
    %v675 = vadd.f32 %v571, %v674
    %v676 = vpop.f32.mrb[0].mxu0
    %677 = vdwg.mxu0
    %678 = vst [vmem:[%s9] sm:$0xff] %v640
    %679 = vst [vmem:[%s9 + $0x8] sm:$0xff] %v645
    %680 = vst [vmem:[%s9 + $0x10] sm:$0xff] %v650
    %681 = vst [vmem:[%s9 + $0x18] sm:$0xff] %v655
    %682 = vst [vmem:[%s9 + $0x20] sm:$0xff] %v660
    %683 = vst [vmem:[%s9 + $0x28] sm:$0xff] %v665
    %684 = vst [vmem:[%s9 + $0x30] sm:$0xff] %v670
    %685 = vst [vmem:[%s9 + $0x38] sm:$0xff] %v675
    // Predicated region
    $region50: #{dqn_forward.1} parent=1 // pred_check
      _
    $region51: #{dqn_forward.1} parent=1 // pred_check_branch
      %687 = sbr.rel (0) target = $region53
    $region52: #{dqn_forward.1} parent=1 // pred_region
      _
    $region53: #{dqn_forward.1} parent=1 // pred_fallthru
      _
    // Predicated region
    $region54: #{dqn_forward.1} parent=1 // pred_check
      _
    $region55: #{dqn_forward.1} parent=1 // pred_check_branch
      %689 = sbr.rel (0) target = $region57
    $region56: #{dqn_forward.1} parent=1 // pred_region
      _
    $region57: #{dqn_forward.1} parent=1 // pred_fallthru
      _
    %690 = vsyncpa [#allocation3], 1
    %691 = vsyncpa [#allocation5], 1

// kernel: dqn_forward.1
$region0: #{dqn_forward.1}
  #allocation0 [shape = 'u32[]', space=smem, size = 0x4, offset = 0x4, fixed_abs, tag = 'smem constant byte address 0x4 - core index']
  #allocation1 [shape = 'u32[144,128]{1,0:T(1,128)}', space=vmem, size = 0x12000, scoped, tag = 'internal scratch']
  %s0 = inlined_call_operand.vmem [shape: f32[64,32], index: 0, kind: input, shape index: {}]
  %s1 = inlined_call_operand.vmem [shape: f32[32,128], index: 1, kind: input, shape index: {}]
  %s2 = inlined_call_operand.vmem [shape: f32[1,128], index: 2, kind: input, shape index: {}]
  %s3 = inlined_call_operand.hbm [shape: f32[128,128], index: 3, kind: input, shape index: {}]
  %s4 = inlined_call_operand.vmem [shape: f32[1,128], index: 4, kind: input, shape index: {}]
  %s5 = inlined_call_operand.hbm [shape: f32[128,128], index: 5, kind: input, shape index: {}]
  %s6 = inlined_call_operand.vmem [shape: f32[1,128], index: 6, kind: input, shape index: {}]
  %s7 = inlined_call_operand.hbm [shape: f32[128,128], index: 7, kind: input, shape index: {}]
  %s8 = inlined_call_operand.vmem [shape: f32[1,128], index: 8, kind: input, shape index: {}]
  %s9 = inlined_call_operand.vmem [shape: f32[64,128], index: 9, kind: output, shape index: {}]
  %s10 = sld [smem:[#allocation0]]
  $region58: #{dqn_forward.1} parent=0
    _
  %s12 = ssub.s32 1, %s10
  %s13 = scalar_select 0, %s12, %s10
  $region1: #{dqn_forward.1} parent=0
    #allocation2 [shape = 'u8[65536]{0}', space=vmem, size = 0x10000, scoped, tag = 'input window, operand 3, single buffered']
    #allocation3 [shape = 's32[1]{0}', space=sflag, size = 0x4, scoped, tag = 'scoped memory for dqn_forward.1']
    #allocation4 [shape = 'u8[65536]{0}', space=vmem, size = 0x10000, scoped, tag = 'input window, operand 5, single buffered']
    #allocation5 [shape = 's32[1]{0}', space=sflag, size = 0x4, scoped, tag = 'scoped memory for dqn_forward.1']
    #allocation6 [shape = 'u8[65536]{0}', space=vmem, size = 0x10000, scoped, tag = 'input window, operand 7, single buffered']
    %14 = vsyncpa [#allocation3], 0
    %15 = vsyncpa [#allocation5], 0
    // Predicated region
    $region2: #{dqn_forward.1} parent=1 // pred_check
      _
    $region3: #{dqn_forward.1} parent=1 // pred_check_branch
      %17 = sbr.rel (0) target = $region5
    $region4: #{dqn_forward.1} parent=1 // pred_region
      _
    $region5: #{dqn_forward.1} parent=1 // pred_fallthru
      _
    // Predicated region
    $region6: #{dqn_forward.1} parent=1 // pred_check
      _
    $region7: #{dqn_forward.1} parent=1 // pred_check_branch
      %19 = sbr.rel (0) target = $region9
    $region8: #{dqn_forward.1} parent=1 // pred_region
      _
    $region9: #{dqn_forward.1} parent=1 // pred_fallthru
      _
    // Predicated region
    $region10: #{dqn_forward.1} parent=1 // pred_check
      _
    $region11: #{dqn_forward.1} parent=1 // pred_check_branch
      %21 = sbr.rel (0) target = $region13
    $region12: #{dqn_forward.1} parent=1 // pred_region
      _
    $region13: #{dqn_forward.1} parent=1 // pred_fallthru
      _
    // Predicated region
    $region14: #{dqn_forward.1} parent=1 // pred_check
      _
    $region15: #{dqn_forward.1} parent=1 // pred_check_branch
      %23 = sbr.rel (0) target = $region17
    $region16: #{dqn_forward.1} parent=1 // pred_region
      %s25 = ssub.s32 2048, 2048
      %26 = vsyncadd [#allocation3], %s25
      %s27 = sshll.u32 [#allocation2], 4
      %s28 = int_to_ptr.vmem [resolvable:$true] %s27
      %33 = dma.hbm_to_vmem [thread:$0]  %s3, 2048, %s28, [#allocation3], 128, 128, 8
    $region17: #{dqn_forward.1} parent=1 // pred_fallthru
      _
    // Predicated region
    $region18: #{dqn_forward.1} parent=1 // pred_check
      _
    $region19: #{dqn_forward.1} parent=1 // pred_check_branch
      %35 = sbr.rel (0) target = $region21
    $region20: #{dqn_forward.1} parent=1 // pred_region
      _
    $region21: #{dqn_forward.1} parent=1 // pred_fallthru
      _
    // Predicated region
    $region22: #{dqn_forward.1} parent=1 // pred_check
      _
    $region23: #{dqn_forward.1} parent=1 // pred_check_branch
      %37 = sbr.rel (0) target = $region25
    $region24: #{dqn_forward.1} parent=1 // pred_region
      %s39 = ssub.s32 2048, 2048
      %40 = vsyncadd [#allocation5], %s39
      %s41 = sshll.u32 [#allocation4], 4
      %s42 = int_to_ptr.vmem [resolvable:$true] %s41
      %47 = dma.hbm_to_vmem [thread:$0]  %s5, 2048, %s42, [#allocation5], 128, 128, 8
    $region25: #{dqn_forward.1} parent=1 // pred_fallthru
      _
    // Predicated region
    $region26: #{dqn_forward.1} parent=1 // pred_check
      _
    $region27: #{dqn_forward.1} parent=1 // pred_check_branch
      %49 = sbr.rel (0) target = $region29
    $region28: #{dqn_forward.1} parent=1 // pred_region
      _
    $region29: #{dqn_forward.1} parent=1 // pred_fallthru
      _
    // Predicated region
    $region30: #{dqn_forward.1} parent=1 // pred_check
      _
    $region31: #{dqn_forward.1} parent=1 // pred_check_branch
      %51 = sbr.rel (0) target = $region33
    $region32: #{dqn_forward.1} parent=1 // pred_region
      %s53 = ssub.s32 2048, 2048
      %54 = vsyncadd [#allocation5], %s53
      %s55 = sshll.u32 [#allocation6], 4
      %s56 = int_to_ptr.vmem [resolvable:$true] %s55
      %61 = dma.hbm_to_vmem [thread:$0]  %s7, 2048, %s56, [#allocation5], 128, 128, 8
    $region33: #{dqn_forward.1} parent=1 // pred_fallthru
      _
    // Predicated region
    $region34: #{dqn_forward.1} parent=1 // pred_check
      _
    $region35: #{dqn_forward.1} parent=1 // pred_check_branch
      %63 = sbr.rel (0) target = $region37
    $region36: #{dqn_forward.1} parent=1 // pred_region
      _
    $region37: #{dqn_forward.1} parent=1 // pred_fallthru
      _
    // Predicated region
    $region38: #{dqn_forward.1} parent=1 // pred_check
      _
    $region39: #{dqn_forward.1} parent=1 // pred_check_branch
      %65 = sbr.rel (0) target = $region41
    $region40: #{dqn_forward.1} parent=1 // pred_region
      %66 = dma.done [#allocation3], 2048
    $region41: #{dqn_forward.1} parent=1 // pred_fallthru
      _
    // Predicated region
    $region42: #{dqn_forward.1} parent=1 // pred_check
      _
    $region43: #{dqn_forward.1} parent=1 // pred_check_branch
      %68 = sbr.rel (0) target = $region45
    $region44: #{dqn_forward.1} parent=1 // pred_region
      %69 = dma.done [#allocation5], 2048
    $region45: #{dqn_forward.1} parent=1 // pred_fallthru
      _
    // Predicated region
    $region46: #{dqn_forward.1} parent=1 // pred_check
      _
    $region47: #{dqn_forward.1} parent=1 // pred_check_branch
      %71 = sbr.rel (0) target = $region49
    $region48: #{dqn_forward.1} parent=1 // pred_region
      %72 = dma.done [#allocation5], 2048
    $region49: #{dqn_forward.1} parent=1 // pred_fallthru
      _
    %v73 = vld [vmem:[%s0] sm:$0xff]
    %v74 = vld [vmem:[%s0 + $0x8] sm:$0xff]
    %v75 = vld [vmem:[%s0 + $0x10] sm:$0xff]
    %v76 = vld [vmem:[%s0 + $0x18] sm:$0xff]
    %v77 = vld [vmem:[%s0 + $0x20] sm:$0xff]
    %v78 = vld [vmem:[%s0 + $0x28] sm:$0xff]
    %v79 = vld [vmem:[%s0 + $0x30] sm:$0xff]
    %v80 = vld [vmem:[%s0 + $0x38] sm:$0xff]
    %v81 = vld [vmem:[%s1] sm:$0xff]
    %v82 = vld [vmem:[%s1 + $0x8] sm:$0xff]
    %v83 = vld [vmem:[%s1 + $0x10] sm:$0xff]
    %v84 = vld [vmem:[%s1 + $0x18] sm:$0xff]
    %v85 = vld [vmem:[%s2] sm:$0x1]
    %v87 = vlaneseq
    %v88 = vshrl.u32 %v87, 7
    %v89 = vsub.s32 0, %v88
    %v90 = vrot.slane %v85, %v89
    %vm92 = vcmask 261120
    %v94 = vsel %vm92, %v73, 0
    %v97 = vsel %vm92, %v74, 0
    %v100 = vsel %vm92, %v75, 0
    %v103 = vsel %vm92, %v76, 0
    %v106 = vsel %vm92, %v77, 0
    %v109 = vsel %vm92, %v78, 0
    %v112 = vsel %vm92, %v79, 0
    %v115 = vsel %vm92, %v80, 0
    %117 = vmatprep.subr.mxu0 0.0
    %118 = vmatpush1.msra.mxu0 %v81
    %119 = vmatprep.subr.mxu0 0.0
    %120 = vmatpush1.msra.mxu0 %v82
    %121 = vmatprep.subr.mxu0 0.0
    %122 = vmatpush1.msra.mxu0 %v83
    %123 = vmatprep.subr.mxu0 0.0
    %124 = vmatpush1.msra.mxu0 %v84
    %125 = vmatprep.subr.mxu0 0.0
    %126 = vmatpush1.msra.mxu0 0.0
    %127 = vmatprep.subr.mxu0 0.0
    %128 = vmatpush1.msra.mxu0 0.0
    %129 = vmatprep.subr.mxu0 0.0
    %130 = vmatpush1.msra.mxu0 0.0
    %131 = vmatprep.subr.mxu0 0.0
    %132 = vmatpush1.msra.mxu0 0.0
    %133 = vmatprep.subr.mxu0 0.0
    %134 = vmatpush1.msra.mxu0 0.0
    %135 = vmatprep.subr.mxu0 0.0
    %136 = vmatpush1.msra.mxu0 0.0
    %137 = vmatprep.subr.mxu0 0.0
    %138 = vmatpush1.msra.mxu0 0.0
    %139 = vmatprep.subr.mxu0 0.0
    %140 = vmatpush1.msra.mxu0 0.0
    %141 = vmatprep.subr.mxu0 0.0
    %142 = vmatpush1.msra.mxu0 0.0
    %143 = vmatprep.subr.mxu0 0.0
    %144 = vmatpush1.msra.mxu0 0.0
    %145 = vmatprep.subr.mxu0 0.0
    %146 = vmatpush1.msra.mxu0 0.0
    %147 = vmatprep.subr.mxu0 0.0
    %148 = vmatpush1.msra.mxu0 0.0
    %149 = vmatprep.subr.mxu0 0.0
    %150 = vmatpush1.msra.mxu0 0.0
    %151 = vmatprep.subr.mxu0 0.0
    %152 = vmatpush1.msra.mxu0 0.0
    %153 = vmatprep.subr.mxu0 0.0
    %154 = vmatpush1.msra.mxu0 0.0
    %155 = vmatprep.subr.mxu0 0.0
    %156 = vmatpush1.msra.mxu0 0.0
    %157 = vmatprep.subr.mxu0 0.0
    %158 = vmatpush1.msra.mxu0 0.0
    %159 = vmatprep.subr.mxu0 0.0
    %160 = vmatpush1.msra.mxu0 0.0
    %161 = vmatprep.subr.mxu0 0.0
    %162 = vmatpush1.msra.mxu0 0.0
    %163 = vmatprep.subr.mxu0 0.0
    %164 = vmatpush1.msra.mxu0 0.0
    %165 = vmatprep.subr.mxu0 0.0
    %166 = vmatpush1.msra.mxu0 0.0
    %167 = vmatprep.subr.mxu0 0.0
    %168 = vmatpush1.msra.mxu0 0.0
    %169 = vmatprep.subr.mxu0 0.0
    %170 = vmatpush1.msra.mxu0 0.0
    %171 = vmatprep.subr.mxu0 0.0
    %172 = vmatpush1.msra.mxu0 0.0
    %173 = vmatprep.subr.mxu0 0.0
    %174 = vmatpush1.msra.mxu0 0.0
    %175 = vmatprep.subr.mxu0 0.0
    %176 = vmatpush1.msra.mxu0 0.0
    %177 = vmatprep.subr.mxu0 0.0
    %178 = vmatpush1.msra.mxu0 0.0
    %179 = vmatprep.subr.mxu0 0.0
    %180 = vmatpush1.msra.mxu0 0.0
    %181 = vmatprep.mubr.f32.mxu0 0.0
    %182 = vmatmul.mubr.f32.gmra.mrb[0].mxu0 %v94
    %v183 = vpop.f32.mrb[0].mxu0
    %v184 = vadd.f32 %v90, %v183
    %v185 = vpop.f32.mrb[0].mxu0
    %186 = vmatprep.mubr.f32.mxu0 0.0
    %187 = vmatmul.mubr.f32.gmra.mrb[0].mxu0 %v97
    %v188 = vpop.f32.mrb[0].mxu0
    %v189 = vadd.f32 %v90, %v188
    %v190 = vpop.f32.mrb[0].mxu0
    %191 = vmatprep.mubr.f32.mxu0 0.0
    %192 = vmatmul.mubr.f32.gmra.mrb[0].mxu0 %v100
    %v193 = vpop.f32.mrb[0].mxu0
    %v194 = vadd.f32 %v90, %v193
    %v195 = vpop.f32.mrb[0].mxu0
    %196 = vmatprep.mubr.f32.mxu0 0.0
    %197 = vmatmul.mubr.f32.gmra.mrb[0].mxu0 %v103
    %v198 = vpop.f32.mrb[0].mxu0
    %v199 = vadd.f32 %v90, %v198
    %v200 = vpop.f32.mrb[0].mxu0
    %201 = vmatprep.mubr.f32.mxu0 0.0
    %202 = vmatmul.mubr.f32.gmra.mrb[0].mxu0 %v106
    %v203 = vpop.f32.mrb[0].mxu0
    %v204 = vadd.f32 %v90, %v203
    %v205 = vpop.f32.mrb[0].mxu0
    %206 = vmatprep.mubr.f32.mxu0 0.0
    %207 = vmatmul.mubr.f32.gmra.mrb[0].mxu0 %v109
    %v208 = vpop.f32.mrb[0].mxu0
    %v209 = vadd.f32 %v90, %v208
    %v210 = vpop.f32.mrb[0].mxu0
    %211 = vmatprep.mubr.f32.mxu0 0.0
    %212 = vmatmul.mubr.f32.gmra.mrb[0].mxu0 %v112
    %v213 = vpop.f32.mrb[0].mxu0
    %v214 = vadd.f32 %v90, %v213
    %v215 = vpop.f32.mrb[0].mxu0
    %216 = vmatprep.mubr.f32.mxu0 0.0
    %217 = vmatmul.mubr.f32.gmra.mrb[0].mxu0 %v115
    %v218 = vpop.f32.mrb[0].mxu0
    %v219 = vadd.f32 %v90, %v218
    %v220 = vpop.f32.mrb[0].mxu0
    %221 = vdwg.mxu0
    %vm222 = vcmp.ge.f32.partialorder %v184, 0.0
    %vm223 = vcmp.ge.f32.partialorder %v189, 0.0
    %vm224 = vcmp.ge.f32.partialorder %v194, 0.0
    %vm225 = vcmp.ge.f32.partialorder %v199, 0.0
    %vm226 = vcmp.ge.f32.partialorder %v204, 0.0
    %vm227 = vcmp.ge.f32.partialorder %v209, 0.0
    %vm228 = vcmp.ge.f32.partialorder %v214, 0.0
    %vm229 = vcmp.ge.f32.partialorder %v219, 0.0
    %v230 = vmul.f32 %v184, 0.01
    %v231 = vmul.f32 %v189, 0.01
    %v232 = vmul.f32 %v194, 0.01
    %v233 = vmul.f32 %v199, 0.01
    %v234 = vmul.f32 %v204, 0.01
    %v235 = vmul.f32 %v209, 0.01
    %v236 = vmul.f32 %v214, 0.01
    %v237 = vmul.f32 %v219, 0.01
    %v238 = vsel %vm222, %v184, %v230
    %v239 = vsel %vm223, %v189, %v231
    %v240 = vsel %vm224, %v194, %v232
    %v241 = vsel %vm225, %v199, %v233
    %v242 = vsel %vm226, %v204, %v234
    %v243 = vsel %vm227, %v209, %v235
    %v244 = vsel %vm228, %v214, %v236
    %v245 = vsel %vm229, %v219, %v237
    %v246 = vld [vmem:[#allocation2] sm:$0xff]
    %v247 = vld [vmem:[#allocation2 + $0x8] sm:$0xff]
    %v248 = vld [vmem:[#allocation2 + $0x10] sm:$0xff]
    %v249 = vld [vmem:[#allocation2 + $0x18] sm:$0xff]
    %v250 = vld [vmem:[#allocation2 + $0x20] sm:$0xff]
    %v251 = vld [vmem:[#allocation2 + $0x28] sm:$0xff]
    %v252 = vld [vmem:[#allocation2 + $0x30] sm:$0xff]
    %v253 = vld [vmem:[#allocation2 + $0x38] sm:$0xff]
    %v254 = vld [vmem:[#allocation2 + $0x40] sm:$0xff]
    %v255 = vld [vmem:[#allocation2 + $0x48] sm:$0xff]
    %v256 = vld [vmem:[#allocation2 + $0x50] sm:$0xff]
    %v257 = vld [vmem:[#allocation2 + $0x58] sm:$0xff]
    %v258 = vld [vmem:[#allocation2 + $0x60] sm:$0xff]
    %v259 = vld [vmem:[#allocation2 + $0x68] sm:$0xff]
    %v260 = vld [vmem:[#allocation2 + $0x70] sm:$0xff]
    %v261 = vld [vmem:[#allocation2 + $0x78] sm:$0xff]
    %v262 = vld [vmem:[%s4] sm:$0x1]
    %v264 = vlaneseq
    %v265 = vshrl.u32 %v264, 7
    %v266 = vsub.s32 0, %v265
    %v267 = vrot.slane %v262, %v266
    %269 = vmatprep.subr.mxu0 0.0
    %270 = vmatpush1.msra.mxu0 %v246
    %271 = vmatprep.subr.mxu0 0.0
    %272 = vmatpush1.msra.mxu0 %v247
    %273 = vmatprep.subr.mxu0 0.0
    %274 = vmatpush1.msra.mxu0 %v248
    %275 = vmatprep.subr.mxu0 0.0
    %276 = vmatpush1.msra.mxu0 %v249
    %277 = vmatprep.subr.mxu0 0.0
    %278 = vmatpush1.msra.mxu0 %v250
    %279 = vmatprep.subr.mxu0 0.0
    %280 = vmatpush1.msra.mxu0 %v251
    %281 = vmatprep.subr.mxu0 0.0
    %282 = vmatpush1.msra.mxu0 %v252
    %283 = vmatprep.subr.mxu0 0.0
    %284 = vmatpush1.msra.mxu0 %v253
    %285 = vmatprep.subr.mxu0 0.0
    %286 = vmatpush1.msra.mxu0 %v254
    %287 = vmatprep.subr.mxu0 0.0
    %288 = vmatpush1.msra.mxu0 %v255
    %289 = vmatprep.subr.mxu0 0.0
    %290 = vmatpush1.msra.mxu0 %v256
    %291 = vmatprep.subr.mxu0 0.0
    %292 = vmatpush1.msra.mxu0 %v257
    %293 = vmatprep.subr.mxu0 0.0
    %294 = vmatpush1.msra.mxu0 %v258
    %295 = vmatprep.subr.mxu0 0.0
    %296 = vmatpush1.msra.mxu0 %v259
    %297 = vmatprep.subr.mxu0 0.0
    %298 = vmatpush1.msra.mxu0 %v260
    %299 = vmatprep.subr.mxu0 0.0
    %300 = vmatpush1.msra.mxu0 %v261
    %301 = vmatprep.subr.mxu0 0.0
    %302 = vmatpush1.msra.mxu0 0.0
    %303 = vmatprep.subr.mxu0 0.0
    %304 = vmatpush1.msra.mxu0 0.0
    %305 = vmatprep.subr.mxu0 0.0
    %306 = vmatpush1.msra.mxu0 0.0
    %307 = vmatprep.subr.mxu0 0.0
    %308 = vmatpush1.msra.mxu0 0.0
    %309 = vmatprep.subr.mxu0 0.0
    %310 = vmatpush1.msra.mxu0 0.0
    %311 = vmatprep.subr.mxu0 0.0
    %312 = vmatpush1.msra.mxu0 0.0
    %313 = vmatprep.subr.mxu0 0.0
    %314 = vmatpush1.msra.mxu0 0.0
    %315 = vmatprep.subr.mxu0 0.0
    %316 = vmatpush1.msra.mxu0 0.0
    %317 = vmatprep.subr.mxu0 0.0
    %318 = vmatpush1.msra.mxu0 0.0
    %319 = vmatprep.subr.mxu0 0.0
    %320 = vmatpush1.msra.mxu0 0.0
    %321 = vmatprep.subr.mxu0 0.0
    %322 = vmatpush1.msra.mxu0 0.0
    %323 = vmatprep.subr.mxu0 0.0
    %324 = vmatpush1.msra.mxu0 0.0
    %325 = vmatprep.subr.mxu0 0.0
    %326 = vmatpush1.msra.mxu0 0.0
    %327 = vmatprep.subr.mxu0 0.0
    %328 = vmatpush1.msra.mxu0 0.0
    %329 = vmatprep.subr.mxu0 0.0
    %330 = vmatpush1.msra.mxu0 0.0
    %331 = vmatprep.subr.mxu0 0.0
    %332 = vmatpush1.msra.mxu0 0.0
    %333 = vmatprep.mubr.f32.mxu0 0.0
    %334 = vmatmul.mubr.f32.gmra.mrb[0].mxu0 %v238
    %v335 = vpop.f32.mrb[0].mxu0
    %v336 = vadd.f32 %v267, %v335
    %v337 = vpop.f32.mrb[0].mxu0
    %338 = vmatprep.mubr.f32.mxu0 0.0
    %339 = vmatmul.mubr.f32.gmra.mrb[0].mxu0 %v239
    %v340 = vpop.f32.mrb[0].mxu0
    %v341 = vadd.f32 %v267, %v340
    %v342 = vpop.f32.mrb[0].mxu0
    %343 = vmatprep.mubr.f32.mxu0 0.0
    %344 = vmatmul.mubr.f32.gmra.mrb[0].mxu0 %v240
    %v345 = vpop.f32.mrb[0].mxu0
    %v346 = vadd.f32 %v267, %v345
    %v347 = vpop.f32.mrb[0].mxu0
    %348 = vmatprep.mubr.f32.mxu0 0.0
    %349 = vmatmul.mubr.f32.gmra.mrb[0].mxu0 %v241
    %v350 = vpop.f32.mrb[0].mxu0
    %v351 = vadd.f32 %v267, %v350
    %v352 = vpop.f32.mrb[0].mxu0
    %353 = vmatprep.mubr.f32.mxu0 0.0
    %354 = vmatmul.mubr.f32.gmra.mrb[0].mxu0 %v242
    %v355 = vpop.f32.mrb[0].mxu0
    %v356 = vadd.f32 %v267, %v355
    %v357 = vpop.f32.mrb[0].mxu0
    %358 = vmatprep.mubr.f32.mxu0 0.0
    %359 = vmatmul.mubr.f32.gmra.mrb[0].mxu0 %v243
    %v360 = vpop.f32.mrb[0].mxu0
    %v361 = vadd.f32 %v267, %v360
    %v362 = vpop.f32.mrb[0].mxu0
    %363 = vmatprep.mubr.f32.mxu0 0.0
    %364 = vmatmul.mubr.f32.gmra.mrb[0].mxu0 %v244
    %v365 = vpop.f32.mrb[0].mxu0
    %v366 = vadd.f32 %v267, %v365
    %v367 = vpop.f32.mrb[0].mxu0
    %368 = vmatprep.mubr.f32.mxu0 0.0
    %369 = vmatmul.mubr.f32.gmra.mrb[0].mxu0 %v245
    %v370 = vpop.f32.mrb[0].mxu0
    %v371 = vadd.f32 %v267, %v370
    %v372 = vpop.f32.mrb[0].mxu0
    %373 = vdwg.mxu0
    %vm374 = vcmp.ge.f32.partialorder %v336, 0.0
    %vm375 = vcmp.ge.f32.partialorder %v341, 0.0
    %vm376 = vcmp.ge.f32.partialorder %v346, 0.0
    %vm377 = vcmp.ge.f32.partialorder %v351, 0.0
    %vm378 = vcmp.ge.f32.partialorder %v356, 0.0
    %vm379 = vcmp.ge.f32.partialorder %v361, 0.0
    %vm380 = vcmp.ge.f32.partialorder %v366, 0.0
    %vm381 = vcmp.ge.f32.partialorder %v371, 0.0
    %v382 = vmul.f32 %v336, 0.01
    %v383 = vmul.f32 %v341, 0.01
    %v384 = vmul.f32 %v346, 0.01
    %v385 = vmul.f32 %v351, 0.01
    %v386 = vmul.f32 %v356, 0.01
    %v387 = vmul.f32 %v361, 0.01
    %v388 = vmul.f32 %v366, 0.01
    %v389 = vmul.f32 %v371, 0.01
    %v390 = vsel %vm374, %v336, %v382
    %v391 = vsel %vm375, %v341, %v383
    %v392 = vsel %vm376, %v346, %v384
    %v393 = vsel %vm377, %v351, %v385
    %v394 = vsel %vm378, %v356, %v386
    %v395 = vsel %vm379, %v361, %v387
    %v396 = vsel %vm380, %v366, %v388
    %v397 = vsel %vm381, %v371, %v389
    %v398 = vld [vmem:[#allocation4] sm:$0xff]
    %v399 = vld [vmem:[#allocation4 + $0x8] sm:$0xff]
    %v400 = vld [vmem:[#allocation4 + $0x10] sm:$0xff]
    %v401 = vld [vmem:[#allocation4 + $0x18] sm:$0xff]
    %v402 = vld [vmem:[#allocation4 + $0x20] sm:$0xff]
    %v403 = vld [vmem:[#allocation4 + $0x28] sm:$0xff]
    %v404 = vld [vmem:[#allocation4 + $0x30] sm:$0xff]
    %v405 = vld [vmem:[#allocation4 + $0x38] sm:$0xff]
    %v406 = vld [vmem:[#allocation4 + $0x40] sm:$0xff]
    %v407 = vld [vmem:[#allocation4 + $0x48] sm:$0xff]
    %v408 = vld [vmem:[#allocation4 + $0x50] sm:$0xff]
    %v409 = vld [vmem:[#allocation4 + $0x58] sm:$0xff]
    %v410 = vld [vmem:[#allocation4 + $0x60] sm:$0xff]
    %v411 = vld [vmem:[#allocation4 + $0x68] sm:$0xff]
    %v412 = vld [vmem:[#allocation4 + $0x70] sm:$0xff]
    %v413 = vld [vmem:[#allocation4 + $0x78] sm:$0xff]
    %v414 = vld [vmem:[%s6] sm:$0x1]
    %v416 = vlaneseq
    %v417 = vshrl.u32 %v416, 7
    %v418 = vsub.s32 0, %v417
    %v419 = vrot.slane %v414, %v418
    %421 = vmatprep.subr.mxu0 0.0
    %422 = vmatpush1.msra.mxu0 %v398
    %423 = vmatprep.subr.mxu0 0.0
    %424 = vmatpush1.msra.mxu0 %v399
    %425 = vmatprep.subr.mxu0 0.0
    %426 = vmatpush1.msra.mxu0 %v400
    %427 = vmatprep.subr.mxu0 0.0
    %428 = vmatpush1.msra.mxu0 %v401
    %429 = vmatprep.subr.mxu0 0.0
    %430 = vmatpush1.msra.mxu0 %v402
    %431 = vmatprep.subr.mxu0 0.0
    %432 = vmatpush1.msra.mxu0 %v403
    %433 = vmatprep.subr.mxu0 0.0
    %434 = vmatpush1.msra.mxu0 %v404
    %435 = vmatprep.subr.mxu0 0.0
    %436 = vmatpush1.msra.mxu0 %v405
    %437 = vmatprep.subr.mxu0 0.0
    %438 = vmatpush1.msra.mxu0 %v406
    %439 = vmatprep.subr.mxu0 0.0
    %440 = vmatpush1.msra.mxu0 %v407
    %441 = vmatprep.subr.mxu0 0.0
    %442 = vmatpush1.msra.mxu0 %v408
    %443 = vmatprep.subr.mxu0 0.0
    %444 = vmatpush1.msra.mxu0 %v409
    %445 = vmatprep.subr.mxu0 0.0
    %446 = vmatpush1.msra.mxu0 %v410
    %447 = vmatprep.subr.mxu0 0.0
    %448 = vmatpush1.msra.mxu0 %v411
    %449 = vmatprep.subr.mxu0 0.0
    %450 = vmatpush1.msra.mxu0 %v412
    %451 = vmatprep.subr.mxu0 0.0
    %452 = vmatpush1.msra.mxu0 %v413
    %453 = vmatprep.subr.mxu0 0.0
    %454 = vmatpush1.msra.mxu0 0.0
    %455 = vmatprep.subr.mxu0 0.0
    %456 = vmatpush1.msra.mxu0 0.0
    %457 = vmatprep.subr.mxu0 0.0
    %458 = vmatpush1.msra.mxu0 0.0
    %459 = vmatprep.subr.mxu0 0.0
    %460 = vmatpush1.msra.mxu0 0.0
    %461 = vmatprep.subr.mxu0 0.0
    %462 = vmatpush1.msra.mxu0 0.0
    %463 = vmatprep.subr.mxu0 0.0
    %464 = vmatpush1.msra.mxu0 0.0
    %465 = vmatprep.subr.mxu0 0.0
    %466 = vmatpush1.msra.mxu0 0.0
    %467 = vmatprep.subr.mxu0 0.0
    %468 = vmatpush1.msra.mxu0 0.0
    %469 = vmatprep.subr.mxu0 0.0
    %470 = vmatpush1.msra.mxu0 0.0
    %471 = vmatprep.subr.mxu0 0.0
    %472 = vmatpush1.msra.mxu0 0.0
    %473 = vmatprep.subr.mxu0 0.0
    %474 = vmatpush1.msra.mxu0 0.0
    %475 = vmatprep.subr.mxu0 0.0
    %476 = vmatpush1.msra.mxu0 0.0
    %477 = vmatprep.subr.mxu0 0.0
    %478 = vmatpush1.msra.mxu0 0.0
    %479 = vmatprep.subr.mxu0 0.0
    %480 = vmatpush1.msra.mxu0 0.0
    %481 = vmatprep.subr.mxu0 0.0
    %482 = vmatpush1.msra.mxu0 0.0
    %483 = vmatprep.subr.mxu0 0.0
    %484 = vmatpush1.msra.mxu0 0.0
    %485 = vmatprep.mubr.f32.mxu0 0.0
    %486 = vmatmul.mubr.f32.gmra.mrb[0].mxu0 %v390
    %v487 = vpop.f32.mrb[0].mxu0
    %v488 = vadd.f32 %v419, %v487
    %v489 = vpop.f32.mrb[0].mxu0
    %490 = vmatprep.mubr.f32.mxu0 0.0
    %491 = vmatmul.mubr.f32.gmra.mrb[0].mxu0 %v391
    %v492 = vpop.f32.mrb[0].mxu0
    %v493 = vadd.f32 %v419, %v492
    %v494 = vpop.f32.mrb[0].mxu0
    %495 = vmatprep.mubr.f32.mxu0 0.0
    %496 = vmatmul.mubr.f32.gmra.mrb[0].mxu0 %v392
    %v497 = vpop.f32.mrb[0].mxu0
    %v498 = vadd.f32 %v419, %v497
    %v499 = vpop.f32.mrb[0].mxu0
    %500 = vmatprep.mubr.f32.mxu0 0.0
    %501 = vmatmul.mubr.f32.gmra.mrb[0].mxu0 %v393
    %v502 = vpop.f32.mrb[0].mxu0
    %v503 = vadd.f32 %v419, %v502
    %v504 = vpop.f32.mrb[0].mxu0
    %505 = vmatprep.mubr.f32.mxu0 0.0
    %506 = vmatmul.mubr.f32.gmra.mrb[0].mxu0 %v394
    %v507 = vpop.f32.mrb[0].mxu0
    %v508 = vadd.f32 %v419, %v507
    %v509 = vpop.f32.mrb[0].mxu0
    %510 = vmatprep.mubr.f32.mxu0 0.0
    %511 = vmatmul.mubr.f32.gmra.mrb[0].mxu0 %v395
    %v512 = vpop.f32.mrb[0].mxu0
    %v513 = vadd.f32 %v419, %v512
    %v514 = vpop.f32.mrb[0].mxu0
    %515 = vmatprep.mubr.f32.mxu0 0.0
    %516 = vmatmul.mubr.f32.gmra.mrb[0].mxu0 %v396
    %v517 = vpop.f32.mrb[0].mxu0
    %v518 = vadd.f32 %v419, %v517
    %v519 = vpop.f32.mrb[0].mxu0
    %520 = vmatprep.mubr.f32.mxu0 0.0
    %521 = vmatmul.mubr.f32.gmra.mrb[0].mxu0 %v397
    %v522 = vpop.f32.mrb[0].mxu0
    %v523 = vadd.f32 %v419, %v522
    %v524 = vpop.f32.mrb[0].mxu0
    %525 = vdwg.mxu0
    %vm526 = vcmp.ge.f32.partialorder %v488, 0.0
    %vm527 = vcmp.ge.f32.partialorder %v493, 0.0
    %vm528 = vcmp.ge.f32.partialorder %v498, 0.0
    %vm529 = vcmp.ge.f32.partialorder %v503, 0.0
    %vm530 = vcmp.ge.f32.partialorder %v508, 0.0
    %vm531 = vcmp.ge.f32.partialorder %v513, 0.0
    %vm532 = vcmp.ge.f32.partialorder %v518, 0.0
    %vm533 = vcmp.ge.f32.partialorder %v523, 0.0
    %v534 = vmul.f32 %v488, 0.01
    %v535 = vmul.f32 %v493, 0.01
    %v536 = vmul.f32 %v498, 0.01
    %v537 = vmul.f32 %v503, 0.01
    %v538 = vmul.f32 %v508, 0.01
    %v539 = vmul.f32 %v513, 0.01
    %v540 = vmul.f32 %v518, 0.01
    %v541 = vmul.f32 %v523, 0.01
    %v542 = vsel %vm526, %v488, %v534
    %v543 = vsel %vm527, %v493, %v535
    %v544 = vsel %vm528, %v498, %v536
    %v545 = vsel %vm529, %v503, %v537
    %v546 = vsel %vm530, %v508, %v538
    %v547 = vsel %vm531, %v513, %v539
    %v548 = vsel %vm532, %v518, %v540
    %v549 = vsel %vm533, %v523, %v541
    %v550 = vld [vmem:[#allocation6] sm:$0xff]
    %v551 = vld [vmem:[#allocation6 + $0x8] sm:$0xff]
    %v552 = vld [vmem:[#allocation6 + $0x10] sm:$0xff]
    %v553 = vld [vmem:[#allocation6 + $0x18] sm:$0xff]
    %v554 = vld [vmem:[#allocation6 + $0x20] sm:$0xff]
    %v555 = vld [vmem:[#allocation6 + $0x28] sm:$0xff]
    %v556 = vld [vmem:[#allocation6 + $0x30] sm:$0xff]
    %v557 = vld [vmem:[#allocation6 + $0x38] sm:$0xff]
    %v558 = vld [vmem:[#allocation6 + $0x40] sm:$0xff]
    %v559 = vld [vmem:[#allocation6 + $0x48] sm:$0xff]
    %v560 = vld [vmem:[#allocation6 + $0x50] sm:$0xff]
    %v561 = vld [vmem:[#allocation6 + $0x58] sm:$0xff]
    %v562 = vld [vmem:[#allocation6 + $0x60] sm:$0xff]
    %v563 = vld [vmem:[#allocation6 + $0x68] sm:$0xff]
    %v564 = vld [vmem:[#allocation6 + $0x70] sm:$0xff]
    %v565 = vld [vmem:[#allocation6 + $0x78] sm:$0xff]
    %v566 = vld [vmem:[%s8] sm:$0x1]
    %v568 = vlaneseq
    %v569 = vshrl.u32 %v568, 7
    %v570 = vsub.s32 0, %v569
    %v571 = vrot.slane %v566, %v570
    %573 = vmatprep.subr.mxu0 0.0
    %574 = vmatpush1.msra.mxu0 %v550
    %575 = vmatprep.subr.mxu0 0.0
    %576 = vmatpush1.msra.mxu0 %v551
    %577 = vmatprep.subr.mxu0 0.0
    %578 = vmatpush1.msra.mxu0 %v552
    %579 = vmatprep.subr.mxu0 0.0
    %580 = vmatpush1.msra.mxu0 %v553
    %581 = vmatprep.subr.mxu0 0.0
    %582 = vmatpush1.msra.mxu0 %v554
    %583 = vmatprep.subr.mxu0 0.0
    %584 = vmatpush1.msra.mxu0 %v555
    %585 = vmatprep.subr.mxu0 0.0
    %586 = vmatpush1.msra.mxu0 %v556
    %587 = vmatprep.subr.mxu0 0.0
    %588 = vmatpush1.msra.mxu0 %v557
    %589 = vmatprep.subr.mxu0 0.0
    %590 = vmatpush1.msra.mxu0 %v558
    %591 = vmatprep.subr.mxu0 0.0
    %592 = vmatpush1.msra.mxu0 %v559
    %593 = vmatprep.subr.mxu0 0.0
    %594 = vmatpush1.msra.mxu0 %v560
    %595 = vmatprep.subr.mxu0 0.0
    %596 = vmatpush1.msra.mxu0 %v561
    %597 = vmatprep.subr.mxu0 0.0
    %598 = vmatpush1.msra.mxu0 %v562
    %599 = vmatprep.subr.mxu0 0.0
    %600 = vmatpush1.msra.mxu0 %v563
    %601 = vmatprep.subr.mxu0 0.0
    %602 = vmatpush1.msra.mxu0 %v564
    %603 = vmatprep.subr.mxu0 0.0
    %604 = vmatpush1.msra.mxu0 %v565
    %605 = vmatprep.subr.mxu0 0.0
    %606 = vmatpush1.msra.mxu0 0.0
    %607 = vmatprep.subr.mxu0 0.0
    %608 = vmatpush1.msra.mxu0 0.0
    %609 = vmatprep.subr.mxu0 0.0
    %610 = vmatpush1.msra.mxu0 0.0
    %611 = vmatprep.subr.mxu0 0.0
    %612 = vmatpush1.msra.mxu0 0.0
    %613 = vmatprep.subr.mxu0 0.0
    %614 = vmatpush1.msra.mxu0 0.0
    %615 = vmatprep.subr.mxu0 0.0
    %616 = vmatpush1.msra.mxu0 0.0
    %617 = vmatprep.subr.mxu0 0.0
    %618 = vmatpush1.msra.mxu0 0.0
    %619 = vmatprep.subr.mxu0 0.0
    %620 = vmatpush1.msra.mxu0 0.0
    %621 = vmatprep.subr.mxu0 0.0
    %622 = vmatpush1.msra.mxu0 0.0
    %623 = vmatprep.subr.mxu0 0.0
    %624 = vmatpush1.msra.mxu0 0.0
    %625 = vmatprep.subr.mxu0 0.0
    %626 = vmatpush1.msra.mxu0 0.0
    %627 = vmatprep.subr.mxu0 0.0
    %628 = vmatpush1.msra.mxu0 0.0
    %629 = vmatprep.subr.mxu0 0.0
    %630 = vmatpush1.msra.mxu0 0.0
    %631 = vmatprep.subr.mxu0 0.0
    %632 = vmatpush1.msra.mxu0 0.0
    %633 = vmatprep.subr.mxu0 0.0
    %634 = vmatpush1.msra.mxu0 0.0
    %635 = vmatprep.subr.mxu0 0.0
    %636 = vmatpush1.msra.mxu0 0.0
    %637 = vmatprep.mubr.f32.mxu0 0.0
    %638 = vmatmul.mubr.f32.gmra.mrb[0].mxu0 %v542
    %v639 = vpop.f32.mrb[0].mxu0
    %v640 = vadd.f32 %v571, %v639
    %v641 = vpop.f32.mrb[0].mxu0
    %642 = vmatprep.mubr.f32.mxu0 0.0
    %643 = vmatmul.mubr.f32.gmra.mrb[0].mxu0 %v543
    %v644 = vpop.f32.mrb[0].mxu0
    %v645 = vadd.f32 %v571, %v644
    %v646 = vpop.f32.mrb[0].mxu0
    %647 = vmatprep.mubr.f32.mxu0 0.0
    %648 = vmatmul.mubr.f32.gmra.mrb[0].mxu0 %v544
    %v649 = vpop.f32.mrb[0].mxu0
    %v650 = vadd.f32 %v571, %v649
    %v651 = vpop.f32.mrb[0].mxu0
    %652 = vmatprep.mubr.f32.mxu0 0.0
    %653 = vmatmul.mubr.f32.gmra.mrb[0].mxu0 %v545
    %v654 = vpop.f32.mrb[0].mxu0
    %v655 = vadd.f32 %v571, %v654
    %v656 = vpop.f32.mrb[0].mxu0
    %657 = vmatprep.mubr.f32.mxu0 0.0
    %658 = vmatmul.mubr.f32.gmra.mrb[0].mxu0 %v546
    %v659 = vpop.f32.mrb[0].mxu0
    %v660 = vadd.f32 %v571, %v659
    %v661 = vpop.f32.mrb[0].mxu0
    %662 = vmatprep.mubr.f32.mxu0 0.0
    %663 = vmatmul.mubr.f32.gmra.mrb[0].mxu0 %v547
    %v664 = vpop.f32.mrb[0].mxu0
    %v665 = vadd.f32 %v571, %v664
    %v666 = vpop.f32.mrb[0].mxu0
    %667 = vmatprep.mubr.f32.mxu0 0.0
    %668 = vmatmul.mubr.f32.gmra.mrb[0].mxu0 %v548
    %v669 = vpop.f32.mrb[0].mxu0
    %v670 = vadd.f32 %v571, %v669
    %v671 = vpop.f32.mrb[0].mxu0
    %672 = vmatprep.mubr.f32.mxu0 0.0
    %673 = vmatmul.mubr.f32.gmra.mrb[0].mxu0 %v549
    %v674 = vpop.f32.mrb[0].mxu0
    %v675 = vadd.f32 %v571, %v674
    %v676 = vpop.f32.mrb[0].mxu0
    %677 = vdwg.mxu0
    %678 = vst [vmem:[%s9] sm:$0xff] %v640
    %679 = vst [vmem:[%s9 + $0x8] sm:$0xff] %v645
    %680 = vst [vmem:[%s9 + $0x10] sm:$0xff] %v650
    %681 = vst [vmem:[%s9 + $0x18] sm:$0xff] %v655
    %682 = vst [vmem:[%s9 + $0x20] sm:$0xff] %v660
    %683 = vst [vmem:[%s9 + $0x28] sm:$0xff] %v665
    %684 = vst [vmem:[%s9 + $0x30] sm:$0xff] %v670
    %685 = vst [vmem:[%s9 + $0x38] sm:$0xff] %v675
    // Predicated region
    $region50: #{dqn_forward.1} parent=1 // pred_check
      _
    $region51: #{dqn_forward.1} parent=1 // pred_check_branch
      %687 = sbr.rel (0) target = $region53
    $region52: #{dqn_forward.1} parent=1 // pred_region
      _
    $region53: #{dqn_forward.1} parent=1 // pred_fallthru
      _
    // Predicated region
    $region54: #{dqn_forward.1} parent=1 // pred_check
      _
    $region55: #{dqn_forward.1} parent=1 // pred_check_branch
      %689 = sbr.rel (0) target = $region57
    $region56: #{dqn_forward.1} parent=1 // pred_region
      _
    $region57: #{dqn_forward.1} parent=1 // pred_fallthru
      _
    %690 = vsyncpa [#allocation3], 1
    %691 = vsyncpa [#allocation5], 1

</llo_original>
